<compile_context>
chip_gen: v6e
topology: v6e:2x2x1
jax: 0.10.0
libtpu: 0.0.40
codegen_flags: <defaults>
</compile_context>

<pallas_src>
from typing import NamedTuple

import jax
import jax.numpy as jnp
from jax.experimental import pallas as pl
from jax.experimental.pallas import tpu as pltpu

_LANE = 128


def _round_up(n, m=_LANE):
    return ((n + m - 1) // m) * m


def _pad2(a, rows, cols):
    return jnp.pad(a, ((0, rows - a.shape[0]), (0, cols - a.shape[1])))


def _choose_tile_b(B):
    """128-512 row tiles; >=2 tiles when the batch allows it (v7x has 2 TCs on
    the 'parallel' grid axis), few big tiles otherwise (v5e/v6e are single-core
    so the grid is a serial loop and per-step overhead dominates here)."""
    Bp = _round_up(B, _LANE)
    if Bp <= _LANE:
        return _LANE
    half = max(_LANE, (Bp // 2) // _LANE * _LANE)
    return min(512, half)


class VAEDims(NamedTuple):
    d_in: int
    z_dim: int
    d_out: int


def prepare_params(params):
    """Pad all weights/biases to lane-dense (multiple-of-128) shapes, cast
    weights to bf16 and biases to f32, and fuse the mu|log_sigma heads into a
    single (H2p, 2*Zp) operand.  Call ONCE; do not re-run per forward call."""
    (w1, b1, w2, b2, wm, bm, ws, bs, wd1, bd1, wd2, bd2) = params

    D_in, H1 = w1.shape
    H2 = w2.shape[1]
    Z = wm.shape[1]
    G = wd1.shape[1]
    D_out = wd2.shape[1]

    Dp, H1p, H2p = _round_up(D_in), _round_up(H1), _round_up(H2)
    Zp, Gp, Op = _round_up(Z), _round_up(G), _round_up(D_out)

    bf16, f32 = jnp.bfloat16, jnp.float32

    w1p = _pad2(w1, Dp, H1p).astype(bf16)
    w2p = _pad2(w2, H1p, H2p).astype(bf16)
    # fused latent heads: [mu | log_sigma], each padded to Zp lanes so the
    # in-kernel split is a 128-aligned lane slice.
    whp = jnp.concatenate(
        [_pad2(wm, H2p, Zp), _pad2(ws, H2p, Zp)], axis=1).astype(bf16)
    wd1p = _pad2(wd1, Zp, Gp).astype(bf16)
    wd2p = _pad2(wd2, Gp, Op).astype(bf16)

    b1p = _pad2(b1.reshape(1, -1), 1, H1p).astype(f32)
    b2p = _pad2(b2.reshape(1, -1), 1, H2p).astype(f32)
    bhp = jnp.concatenate(
        [_pad2(bm.reshape(1, -1), 1, Zp),
         _pad2(bs.reshape(1, -1), 1, Zp)], axis=1).astype(f32)
    bd1p = _pad2(bd1.reshape(1, -1), 1, Gp).astype(f32)
    bd2p = _pad2(bd2.reshape(1, -1), 1, Op).astype(f32)

    padded = (w1p, b1p, w2p, b2p, whp, bhp, wd1p, bd1p, wd2p, bd2p)
    return padded, VAEDims(D_in, Z, D_out)


def vae_forward(x, eps, padded_params, dims, *, tile_b=None,
                out_dtype=jnp.float32):
    """x: (B, D_in) f32; eps: (B, z_dim) f32; padded_params/dims from
    prepare_params().  Returns (reconstruction, z_mean, z_sigma)."""
    (w1p, b1p, w2p, b2p, whp, bhp, wd1p, bd1p, wd2p, bd2p) = padded_params

    B, d_in = x.shape
    assert d_in == dims.d_in and eps.shape == (B, dims.z_dim)

    Dp, H1p = w1p.shape
    H2p = w2p.shape[1]
    Zp = whp.shape[1] // 2
    Gp = wd1p.shape[1]
    Op = wd2p.shape[1]

    if tile_b is None:
        tile_b = _choose_tile_b(B)
    Bp = _round_up(B, tile_b)
    grid = (Bp // tile_b,)

    bf16, f32 = jnp.bfloat16, jnp.float32

    # Per-call padding only touches the activations (weights are pre-padded).
    xp = _pad2(x, Bp, Dp).astype(bf16)
    ep = _pad2(eps, Bp, Zp).astype(bf16)   # zero padded lanes; bf16 halves DMA

    def resident(shape):
        # Same (0, 0) block for every grid step -> DMA'd once, VMEM-resident.
        return pl.BlockSpec(shape, lambda i: (0, 0))

    def kernel(x_ref, eps_ref, w1_ref, b1_ref, w2_ref, b2_ref, wh_ref, bh_ref,
               wd1_ref, bd1_ref, wd2_ref, bd2_ref, o_ref, mu_ref, sg_ref):
        def dense(a_bf16, w_ref, b_ref):
            # bf16 MXU matmul with f32 accumulation; bias add in f32 (VPU).
            return jnp.dot(a_bf16, w_ref[...],
                           preferred_element_type=f32) + b_ref[...]

        # ---- encoder ----
        h = jnp.maximum(dense(x_ref[...], w1_ref, b1_ref), 0.0).astype(bf16)
        h = jnp.maximum(dense(h, w2_ref, b2_ref), 0.0).astype(bf16)

        # ---- fused latent heads + reparameterization ----
        head = dense(h, wh_ref, bh_ref)          # (tile_b, 2*Zp) f32
        mu = head[:, :Zp]
        sigma = jnp.exp(head[:, Zp:])            # EUP; rides free beside MXU
        z = mu + sigma * eps_ref[...].astype(f32)

        mu_ref[...] = mu.astype(mu_ref.dtype)
        sg_ref[...] = sigma.astype(sg_ref.dtype)

        # ---- decoder ----
        y = jnp.maximum(dense(z.astype(bf16), wd1_ref, bd1_ref), 0.0).astype(bf16)
        y = jnp.maximum(dense(y, wd2_ref, bd2_ref), 0.0)
        o_ref[...] = y.astype(o_ref.dtype)

    inputs = (xp, ep, w1p, b1p, w2p, b2p, whp, bhp, wd1p, bd1p, wd2p, bd2p)

    flops = 2 * Bp * (Dp * H1p + H1p * H2p + H2p * 2 * Zp + Zp * Gp + Gp * Op)
    transcendentals = Bp * Zp
    bytes_accessed = (sum(int(a.size) * a.dtype.itemsize for a in inputs)
                      + Bp * Op * jnp.dtype(out_dtype).itemsize
                      + 2 * Bp * Zp * 4)

    out, mu, sigma = pl.pallas_call(
        kernel,
        out_shape=(jax.ShapeDtypeStruct((Bp, Op), out_dtype),
                   jax.ShapeDtypeStruct((Bp, Zp), f32),
                   jax.ShapeDtypeStruct((Bp, Zp), f32)),
        grid_spec=pltpu.PrefetchScalarGridSpec(
            num_scalar_prefetch=0,
            grid=grid,
            in_specs=[
                pl.BlockSpec((tile_b, Dp), lambda i: (i, 0)),   # x tile
                pl.BlockSpec((tile_b, Zp), lambda i: (i, 0)),   # eps tile
                resident((Dp, H1p)), resident((1, H1p)),        # encoder L1
                resident((H1p, H2p)), resident((1, H2p)),       # encoder L2
                resident((H2p, 2 * Zp)), resident((1, 2 * Zp)), # fused heads
                resident((Zp, Gp)), resident((1, Gp)),          # decoder L1
                resident((Gp, Op)), resident((1, Op)),          # decoder L2
            ],
            out_specs=[
                pl.BlockSpec((tile_b, Op), lambda i: (i, 0)),   # reconstruction
                pl.BlockSpec((tile_b, Zp), lambda i: (i, 0)),   # z_mean
                pl.BlockSpec((tile_b, Zp), lambda i: (i, 0)),   # z_sigma
            ]),
        compiler_params=pltpu.CompilerParams(
            dimension_semantics=("parallel",)),
        cost_estimate=pl.CostEstimate(
            flops=flops,
            transcendentals=transcendentals,
            bytes_accessed=bytes_accessed),
    )(*inputs)

    Z, D_out = dims.z_dim, dims.d_out
    return out[:B, :D_out], mu[:B, :Z], sigma[:B, :Z]


def vae_reference(x, eps, params):
    """Plain-JAX reference with the same bf16-input / f32-accumulate casts."""
    (w1, b1, w2, b2, wm, bm, ws, bs, wd1, bd1, wd2, bd2) = params
    bf = lambda a: a.astype(jnp.bfloat16)
    dot = lambda a, w: jnp.dot(bf(a), bf(w), preferred_element_type=jnp.float32)
    h = jnp.maximum(dot(x, w1) + b1, 0.0)
    h = jnp.maximum(dot(h, w2) + b2, 0.0)
    mu = dot(h, wm) + bm
    sigma = jnp.exp(dot(h, ws) + bs)
    z = mu + sigma * eps.astype(jnp.bfloat16).astype(jnp.float32)
    y = jnp.maximum(dot(z, wd1) + bd1, 0.0)
    y = jnp.maximum(dot(y, wd2) + bd2, 0.0)
    return y, mu, sigma


def init_linear(key, fan_in, fan_out):
    """PyTorch nn.Linear-style uniform init; weight stored as (fan_in, fan_out)."""
    kw, kb = jax.random.split(key)
    bound = 1.0 / (fan_in ** 0.5)
    w = jax.random.uniform(kw, (fan_in, fan_out), jnp.float32, -bound, bound)
    b = jax.random.uniform(kb, (fan_out,), jnp.float32, -bound, bound)
    return w, b


if __name__ == "__main__":
    # Shapes consistent with VAE(Encoder(D_in,100,100), Decoder(16,100,D_in),
    # hidden=100, z_dim=16) on flattened 14x14 inputs.
    B, D_in = 256, 196
    ENC_H, HIDDEN, Z_DIM, DEC_H = 100, 100, 16, 100
    D_out = D_in

    key = jax.random.PRNGKey(0)
    kx, keps, k1, k2, km, ks, kd1, kd2 = jax.random.split(key, 8)

    x = jax.random.normal(kx, (B, D_in), dtype=jnp.float32)
    # Reparameterization noise: PyTorch draws np.random.normal on the host;
    # here it is a deterministic explicit input to keep the kernel pure.
    eps = jax.random.normal(keps, (B, Z_DIM), dtype=jnp.float32)

    w1, b1 = init_linear(k1, D_in, ENC_H)
    w2, b2 = init_linear(k2, ENC_H, HIDDEN)
    wm, bm = init_linear(km, HIDDEN, Z_DIM)
    ws, bs = init_linear(ks, HIDDEN, Z_DIM)
    wd1, bd1 = init_linear(kd1, Z_DIM, DEC_H)
    wd2, bd2 = init_linear(kd2, DEC_H, D_out)

    params = (w1, b1, w2, b2, wm, bm, ws, bs, wd1, bd1, wd2, bd2)

    # Pad/cast/fuse the params once (hoisted out of the per-call path).
    padded_params, dims = prepare_params(params)
    padded_params = jax.block_until_ready(padded_params)

    out, z_mean, z_sigma = vae_forward(x, eps, padded_params, dims)
    jax.block_until_ready((out, z_mean, z_sigma))

    ref_out, ref_mu, ref_sigma = vae_reference(x, eps, params)
    assert out.shape == (B, D_out)
    assert z_mean.shape == (B, Z_DIM) and z_sigma.shape == (B, Z_DIM)
    assert jnp.allclose(out, ref_out, atol=2e-2, rtol=2e-2), "recon mismatch"
    assert jnp.allclose(z_mean, ref_mu, atol=2e-2, rtol=2e-2), "z_mean mismatch"
    assert jnp.allclose(z_sigma, ref_sigma, atol=2e-2, rtol=2e-2), "z_sigma mismatch"

    print("KERNEL_OK")
</pallas_src>

<mosaic_0001>
module attributes {stable_mosaic.version = 11 : i64} {
  func.func @kernel(%arg0: i32, %arg1: memref<128x256xbf16, #tpu.memory_space<vmem>>, %arg2: memref<128x128xbf16, #tpu.memory_space<vmem>>, %arg3: memref<256x128xbf16, #tpu.memory_space<vmem>>, %arg4: memref<1x128xf32, #tpu.memory_space<vmem>>, %arg5: memref<128x128xbf16, #tpu.memory_space<vmem>>, %arg6: memref<1x128xf32, #tpu.memory_space<vmem>>, %arg7: memref<128x256xbf16, #tpu.memory_space<vmem>>, %arg8: memref<1x256xf32, #tpu.memory_space<vmem>>, %arg9: memref<128x128xbf16, #tpu.memory_space<vmem>>, %arg10: memref<1x128xf32, #tpu.memory_space<vmem>>, %arg11: memref<128x256xbf16, #tpu.memory_space<vmem>>, %arg12: memref<1x256xf32, #tpu.memory_space<vmem>>, %arg13: memref<128x256xf32, #tpu.memory_space<vmem>>, %arg14: memref<128x128xf32, #tpu.memory_space<vmem>>, %arg15: memref<128x128xf32, #tpu.memory_space<vmem>>) attributes {dimension_semantics = [#tpu.dimension_semantics<parallel>], iteration_bounds = array<i64: 2>, scalar_prefetch = 0 : i64, scratch_operands = 0 : i64, tpu.core_type = #tpu.core_type<tc>, window_params = [{transform_indices = @transform_0, window_bounds = array<i64: 128, 256>}, {transform_indices = @transform_1, window_bounds = array<i64: 128, 128>}, {pipeline_mode = #tpu.pipeline_mode<synchronous>, transform_indices = @transform_2, window_bounds = array<i64: 256, 128>}, {pipeline_mode = #tpu.pipeline_mode<synchronous>, transform_indices = @transform_3, window_bounds = array<i64: 1, 128>}, {pipeline_mode = #tpu.pipeline_mode<synchronous>, transform_indices = @transform_4, window_bounds = array<i64: 128, 128>}, {pipeline_mode = #tpu.pipeline_mode<synchronous>, transform_indices = @transform_5, window_bounds = array<i64: 1, 128>}, {pipeline_mode = #tpu.pipeline_mode<synchronous>, transform_indices = @transform_6, window_bounds = array<i64: 128, 256>}, {pipeline_mode = #tpu.pipeline_mode<synchronous>, transform_indices = @transform_7, window_bounds = array<i64: 1, 256>}, {pipeline_mode = #tpu.pipeline_mode<synchronous>, transform_indices = @transform_8, window_bounds = array<i64: 128, 128>}, {pipeline_mode = #tpu.pipeline_mode<synchronous>, transform_indices = @transform_9, window_bounds = array<i64: 1, 128>}, {pipeline_mode = #tpu.pipeline_mode<synchronous>, transform_indices = @transform_10, window_bounds = array<i64: 128, 256>}, {pipeline_mode = #tpu.pipeline_mode<synchronous>, transform_indices = @transform_11, window_bounds = array<i64: 1, 256>}, {transform_indices = @transform_12, window_bounds = array<i64: 128, 256>}, {transform_indices = @transform_13, window_bounds = array<i64: 128, 128>}, {transform_indices = @transform_14, window_bounds = array<i64: 128, 128>}]} {
    %c0 = arith.constant 0 : index
    %c0_0 = arith.constant 0 : index
    %0 = vector.load %arg1[%c0, %c0_0] : memref<128x256xbf16, #tpu.memory_space<vmem>>, vector<128x256xbf16>
    %c0_1 = arith.constant 0 : index
    %c0_2 = arith.constant 0 : index
    %1 = vector.load %arg3[%c0_1, %c0_2] : memref<256x128xbf16, #tpu.memory_space<vmem>>, vector<256x128xbf16>
    %cst = arith.constant dense<0.000000e+00> : vector<128x128xf32>
    %2 = tpu.matmul %0, %1, %cst {dimension_numbers = #tpu.dot_dimension_numbers<[1], [0], [0], [1], [0, 0, 1, 1], [], []>} : vector<128x256xbf16>, vector<256x128xbf16>, vector<128x128xf32> -> vector<128x128xf32>
    %c0_3 = arith.constant 0 : index
    %c0_4 = arith.constant 0 : index
    %3 = vector.load %arg4[%c0_3, %c0_4] : memref<1x128xf32, #tpu.memory_space<vmem>>, vector<1x128xf32>
    %4 = vector.broadcast %3 : vector<1x128xf32> to vector<128x128xf32>
    %5 = arith.addf %2, %4 : vector<128x128xf32>
    %cst_5 = arith.constant 0.000000e+00 : f32
    %6 = vector.broadcast %cst_5 : f32 to vector<128x128xf32>
    %7 = arith.maximumf %5, %6 : vector<128x128xf32>
    %8 = arith.truncf %7 : vector<128x128xf32> to vector<128x128xbf16>
    %c0_6 = arith.constant 0 : index
    %c0_7 = arith.constant 0 : index
    %9 = vector.load %arg5[%c0_6, %c0_7] : memref<128x128xbf16, #tpu.memory_space<vmem>>, vector<128x128xbf16>
    %cst_8 = arith.constant dense<0.000000e+00> : vector<128x128xf32>
    %10 = tpu.matmul %8, %9, %cst_8 {dimension_numbers = #tpu.dot_dimension_numbers<[1], [0], [0], [1], [0, 0, 1, 1], [], []>} : vector<128x128xbf16>, vector<128x128xbf16>, vector<128x128xf32> -> vector<128x128xf32>
    %c0_9 = arith.constant 0 : index
    %c0_10 = arith.constant 0 : index
    %11 = vector.load %arg6[%c0_9, %c0_10] : memref<1x128xf32, #tpu.memory_space<vmem>>, vector<1x128xf32>
    %12 = vector.broadcast %11 : vector<1x128xf32> to vector<128x128xf32>
    %13 = arith.addf %10, %12 : vector<128x128xf32>
    %cst_11 = arith.constant 0.000000e+00 : f32
    %14 = vector.broadcast %cst_11 : f32 to vector<128x128xf32>
    %15 = arith.maximumf %13, %14 : vector<128x128xf32>
    %16 = arith.truncf %15 : vector<128x128xf32> to vector<128x128xbf16>
    %c0_12 = arith.constant 0 : index
    %c0_13 = arith.constant 0 : index
    %17 = vector.load %arg7[%c0_12, %c0_13] : memref<128x256xbf16, #tpu.memory_space<vmem>>, vector<128x256xbf16>
    %cst_14 = arith.constant dense<0.000000e+00> : vector<128x256xf32>
    %18 = tpu.matmul %16, %17, %cst_14 {dimension_numbers = #tpu.dot_dimension_numbers<[1], [0], [0], [1], [0, 0, 1, 1], [], []>} : vector<128x128xbf16>, vector<128x256xbf16>, vector<128x256xf32> -> vector<128x256xf32>
    %c0_15 = arith.constant 0 : index
    %c0_16 = arith.constant 0 : index
    %19 = vector.load %arg8[%c0_15, %c0_16] : memref<1x256xf32, #tpu.memory_space<vmem>>, vector<1x256xf32>
    %20 = vector.broadcast %19 : vector<1x256xf32> to vector<128x256xf32>
    %21 = arith.addf %18, %20 : vector<128x256xf32>
    %22 = vector.extract_strided_slice %21 {offsets = [0, 0], sizes = [128, 128], strides = [1, 1]} : vector<128x256xf32> to vector<128x128xf32>
    %23 = vector.extract_strided_slice %21 {offsets = [0, 128], sizes = [128, 128], strides = [1, 1]} : vector<128x256xf32> to vector<128x128xf32>
    %24 = math.exp %23 : vector<128x128xf32>
    %c0_17 = arith.constant 0 : index
    %c0_18 = arith.constant 0 : index
    %25 = vector.load %arg2[%c0_17, %c0_18] : memref<128x128xbf16, #tpu.memory_space<vmem>>, vector<128x128xbf16>
    %26 = arith.extf %25 : vector<128x128xbf16> to vector<128x128xf32>
    %27 = arith.mulf %24, %26 : vector<128x128xf32>
    %28 = arith.addf %22, %27 : vector<128x128xf32>
    %c0_19 = arith.constant 0 : index
    %c0_20 = arith.constant 0 : index
    %29 = vector.load %arg14[%c0_19, %c0_20] : memref<128x128xf32, #tpu.memory_space<vmem>>, vector<128x128xf32>
    tpu.vector_store %arg14[%c0_19, %c0_20], %22 {strides = array<i32>} : memref<128x128xf32, #tpu.memory_space<vmem>>, vector<128x128xf32>,
    %c0_21 = arith.constant 0 : index
    %c0_22 = arith.constant 0 : index
    %30 = vector.load %arg15[%c0_21, %c0_22] : memref<128x128xf32, #tpu.memory_space<vmem>>, vector<128x128xf32>
    tpu.vector_store %arg15[%c0_21, %c0_22], %24 {strides = array<i32>} : memref<128x128xf32, #tpu.memory_space<vmem>>, vector<128x128xf32>,
    %31 = arith.truncf %28 : vector<128x128xf32> to vector<128x128xbf16>
    %c0_23 = arith.constant 0 : index
    %c0_24 = arith.constant 0 : index
    %32 = vector.load %arg9[%c0_23, %c0_24] : memref<128x128xbf16, #tpu.memory_space<vmem>>, vector<128x128xbf16>
    %cst_25 = arith.constant dense<0.000000e+00> : vector<128x128xf32>
    %33 = tpu.matmul %31, %32, %cst_25 {dimension_numbers = #tpu.dot_dimension_numbers<[1], [0], [0], [1], [0, 0, 1, 1], [], []>} : vector<128x128xbf16>, vector<128x128xbf16>, vector<128x128xf32> -> vector<128x128xf32>
    %c0_26 = arith.constant 0 : index
    %c0_27 = arith.constant 0 : index
    %34 = vector.load %arg10[%c0_26, %c0_27] : memref<1x128xf32, #tpu.memory_space<vmem>>, vector<1x128xf32>
    %35 = vector.broadcast %34 : vector<1x128xf32> to vector<128x128xf32>
    %36 = arith.addf %33, %35 : vector<128x128xf32>
    %cst_28 = arith.constant 0.000000e+00 : f32
    %37 = vector.broadcast %cst_28 : f32 to vector<128x128xf32>
    %38 = arith.maximumf %36, %37 : vector<128x128xf32>
    %39 = arith.truncf %38 : vector<128x128xf32> to vector<128x128xbf16>
    %c0_29 = arith.constant 0 : index
    %c0_30 = arith.constant 0 : index
    %40 = vector.load %arg11[%c0_29, %c0_30] : memref<128x256xbf16, #tpu.memory_space<vmem>>, vector<128x256xbf16>
    %cst_31 = arith.constant dense<0.000000e+00> : vector<128x256xf32>
    %41 = tpu.matmul %39, %40, %cst_31 {dimension_numbers = #tpu.dot_dimension_numbers<[1], [0], [0], [1], [0, 0, 1, 1], [], []>} : vector<128x128xbf16>, vector<128x256xbf16>, vector<128x256xf32> -> vector<128x256xf32>
    %c0_32 = arith.constant 0 : index
    %c0_33 = arith.constant 0 : index
    %42 = vector.load %arg12[%c0_32, %c0_33] : memref<1x256xf32, #tpu.memory_space<vmem>>, vector<1x256xf32>
    %43 = vector.broadcast %42 : vector<1x256xf32> to vector<128x256xf32>
    %44 = arith.addf %41, %43 : vector<128x256xf32>
    %cst_34 = arith.constant 0.000000e+00 : f32
    %45 = vector.broadcast %cst_34 : f32 to vector<128x256xf32>
    %46 = arith.maximumf %44, %45 : vector<128x256xf32>
    %c0_35 = arith.constant 0 : index
    %c0_36 = arith.constant 0 : index
    %47 = vector.load %arg13[%c0_35, %c0_36] : memref<128x256xf32, #tpu.memory_space<vmem>>, vector<128x256xf32>
    tpu.vector_store %arg13[%c0_35, %c0_36], %46 {strides = array<i32>} : memref<128x256xf32, #tpu.memory_space<vmem>>, vector<128x256xf32>,
    return
  }
  func.func @transform_0(%arg0: i32) -> (i32, i32) {
    %c0_i32 = arith.constant 0 : i32
    %c0_i32_0 = arith.constant 0 : i32
    return %arg0, %c0_i32 : i32, i32
  }
  func.func @transform_1(%arg0: i32) -> (i32, i32) {
    %c0_i32 = arith.constant 0 : i32
    %c0_i32_0 = arith.constant 0 : i32
    return %arg0, %c0_i32 : i32, i32
  }
  func.func @transform_2(%arg0: i32) -> (i32, i32) {
    %c0_i32 = arith.constant 0 : i32
    %c0_i32_0 = arith.constant 0 : i32
    %c0_i32_1 = arith.constant 0 : i32
    return %c0_i32, %c0_i32_0 : i32, i32
  }
  func.func @transform_3(%arg0: i32) -> (i32, i32) {
    %c0_i32 = arith.constant 0 : i32
    %c0_i32_0 = arith.constant 0 : i32
    %c0_i32_1 = arith.constant 0 : i32
    return %c0_i32, %c0_i32_0 : i32, i32
  }
  func.func @transform_4(%arg0: i32) -> (i32, i32) {
    %c0_i32 = arith.constant 0 : i32
    %c0_i32_0 = arith.constant 0 : i32
    %c0_i32_1 = arith.constant 0 : i32
    return %c0_i32, %c0_i32_0 : i32, i32
  }
  func.func @transform_5(%arg0: i32) -> (i32, i32) {
    %c0_i32 = arith.constant 0 : i32
    %c0_i32_0 = arith.constant 0 : i32
    %c0_i32_1 = arith.constant 0 : i32
    return %c0_i32, %c0_i32_0 : i32, i32
  }
  func.func @transform_6(%arg0: i32) -> (i32, i32) {
    %c0_i32 = arith.constant 0 : i32
    %c0_i32_0 = arith.constant 0 : i32
    %c0_i32_1 = arith.constant 0 : i32
    return %c0_i32, %c0_i32_0 : i32, i32
  }
  func.func @transform_7(%arg0: i32) -> (i32, i32) {
    %c0_i32 = arith.constant 0 : i32
    %c0_i32_0 = arith.constant 0 : i32
    %c0_i32_1 = arith.constant 0 : i32
    return %c0_i32, %c0_i32_0 : i32, i32
  }
  func.func @transform_8(%arg0: i32) -> (i32, i32) {
    %c0_i32 = arith.constant 0 : i32
    %c0_i32_0 = arith.constant 0 : i32
    %c0_i32_1 = arith.constant 0 : i32
    return %c0_i32, %c0_i32_0 : i32, i32
  }
  func.func @transform_9(%arg0: i32) -> (i32, i32) {
    %c0_i32 = arith.constant 0 : i32
    %c0_i32_0 = arith.constant 0 : i32
    %c0_i32_1 = arith.constant 0 : i32
    return %c0_i32, %c0_i32_0 : i32, i32
  }
  func.func @transform_10(%arg0: i32) -> (i32, i32) {
    %c0_i32 = arith.constant 0 : i32
    %c0_i32_0 = arith.constant 0 : i32
    %c0_i32_1 = arith.constant 0 : i32
    return %c0_i32, %c0_i32_0 : i32, i32
  }
  func.func @transform_11(%arg0: i32) -> (i32, i32) {
    %c0_i32 = arith.constant 0 : i32
    %c0_i32_0 = arith.constant 0 : i32
    %c0_i32_1 = arith.constant 0 : i32
    return %c0_i32, %c0_i32_0 : i32, i32
  }
  func.func @transform_12(%arg0: i32) -> (i32, i32) {
    %c0_i32 = arith.constant 0 : i32
    %c0_i32_0 = arith.constant 0 : i32
    return %arg0, %c0_i32 : i32, i32
  }
  func.func @transform_13(%arg0: i32) -> (i32, i32) {
    %c0_i32 = arith.constant 0 : i32
    %c0_i32_0 = arith.constant 0 : i32
    return %arg0, %c0_i32 : i32, i32
  }
  func.func @transform_14(%arg0: i32) -> (i32, i32) {
    %c0_i32 = arith.constant 0 : i32
    %c0_i32_0 = arith.constant 0 : i32
    return %arg0, %c0_i32 : i32, i32
  }
}

</mosaic_0001>

<llo_original>
// kernel: tpu_custom_call.1
$region0: #{tpu_custom_call.1}
  #allocation0 [shape = 'u32[]', space=smem, size = 0x4, offset = 0x4, fixed_abs, tag = 'smem constant byte address 0x4 - core index']
  #allocation1 [shape = 'u32[144,128]{1,0:T(1,128)}', space=vmem, size = 0x12000, scoped, tag = 'internal scratch']
  %s0 = inlined_call_operand.hbm [shape: bf16[256,256], index: 0, kind: input, shape index: {}]
  %s1 = inlined_call_operand.hbm [shape: bf16[256,128], index: 1, kind: input, shape index: {}]
  %s2 = inlined_call_operand.hbm [shape: bf16[256,128], index: 2, kind: input, shape index: {}]
  %s3 = inlined_call_operand.vmem [shape: f32[1,128], index: 3, kind: input, shape index: {}]
  %s4 = inlined_call_operand.hbm [shape: bf16[128,128], index: 4, kind: input, shape index: {}]
  %s5 = inlined_call_operand.vmem [shape: f32[1,128], index: 5, kind: input, shape index: {}]
  %s6 = inlined_call_operand.hbm [shape: bf16[128,256], index: 6, kind: input, shape index: {}]
  %s7 = inlined_call_operand.vmem [shape: f32[1,256], index: 7, kind: input, shape index: {}]
  %s8 = inlined_call_operand.hbm [shape: bf16[128,128], index: 8, kind: input, shape index: {}]
  %s9 = inlined_call_operand.vmem [shape: f32[1,128], index: 9, kind: input, shape index: {}]
  %s10 = inlined_call_operand.hbm [shape: bf16[128,256], index: 10, kind: input, shape index: {}]
  %s11 = inlined_call_operand.vmem [shape: f32[1,256], index: 11, kind: input, shape index: {}]
  %s12 = inlined_call_operand.hbm [shape: f32[256,256], index: 12, kind: output, shape index: {0}]
  %s13 = inlined_call_operand.hbm [shape: f32[256,128], index: 13, kind: output, shape index: {1}]
  %s14 = inlined_call_operand.hbm [shape: f32[256,128], index: 14, kind: output, shape index: {2}]
  %15 = xla_tuple %s12, %s13, %s14
  %s16 = sld [smem:[#allocation0]]
  $region125: #{tpu_custom_call.1} parent=0
    _
  %s18 = ssub.s32 1, %s16
  %s19 = scalar_select 0, %s18, %s16
  $region1: #{tpu_custom_call.1} parent=0
    #allocation2 [shape = 'u8[131072]{0}', space=vmem, size = 0x20000, scoped, tag = 'input window, operand 0']
    #allocation3 [shape = 's32[2]{0}', space=sflag, size = 0x8, scoped, tag = 'scoped memory for tpu_custom_call.1']
    #allocation4 [shape = 's32[2]{0}', space=sflag, size = 0x8, scoped, tag = 'scoped memory for tpu_custom_call.1']
    #allocation5 [shape = 'u8[65536]{0}', space=vmem, size = 0x10000, scoped, tag = 'input window, operand 1']
    #allocation6 [shape = 's32[2]{0}', space=sflag, size = 0x8, scoped, tag = 'scoped memory for tpu_custom_call.1']
    #allocation7 [shape = 'u8[65536]{0}', space=vmem, size = 0x10000, scoped, tag = 'input window, operand 2, single buffered']
    #allocation8 [shape = 'u8[32768]{0}', space=vmem, size = 0x8000, scoped, tag = 'input window, operand 4, single buffered']
    #allocation9 [shape = 's32[1]{0}', space=sflag, size = 0x4, scoped, tag = 'scoped memory for tpu_custom_call.1']
    #allocation10 [shape = 'u8[65536]{0}', space=vmem, size = 0x10000, scoped, tag = 'input window, operand 6, single buffered']
    #allocation11 [shape = 'u8[32768]{0}', space=vmem, size = 0x8000, scoped, tag = 'input window, operand 8, single buffered']
    #allocation12 [shape = 's32[1]{0}', space=sflag, size = 0x4, scoped, tag = 'scoped memory for tpu_custom_call.1']
    #allocation13 [shape = 'u8[65536]{0}', space=vmem, size = 0x10000, scoped, tag = 'input window, operand 10, single buffered']
    #allocation14 [shape = 'u8[262144]{0}', space=vmem, size = 0x40000, scoped, tag = 'output window, operand 0']
    #allocation15 [shape = 'u8[131072]{0}', space=vmem, size = 0x20000, scoped, tag = 'output window, operand 1']
    #allocation16 [shape = 's32[2]{0}', space=sflag, size = 0x8, scoped, tag = 'scoped memory for tpu_custom_call.1']
    #allocation17 [shape = 'u8[131072]{0}', space=vmem, size = 0x20000, scoped, tag = 'output window, operand 2']
    %20 = vsyncpa [#allocation3], 0
    %s21 = scalar_lea.sflag [#allocation3], 1
    %22 = vsyncpa %s21, 0
    %23 = vsyncpa [#allocation6], 0
    %s24 = scalar_lea.sflag [#allocation6], 1
    %25 = vsyncpa %s24, 0
    %26 = vsyncpa [#allocation9], 0
    %27 = vsyncpa [#allocation12], 0
    %28 = vsyncpa [#allocation4], 0
    %s29 = scalar_lea.sflag [#allocation4], 1
    %30 = vsyncpa %s29, 0
    %31 = vsyncpa [#allocation16], 0
    %s32 = scalar_lea.sflag [#allocation16], 1
    %33 = vsyncpa %s32, 0
    loop: start=0, step=1, limit=4
    $region2: #{tpu_custom_call.1} parent=1 // loop_pre_header
      _
    $region3: #{tpu_custom_call.1} parent=1 // loop_header
      %s35 = sphi 0, %s39
      %p36 = scmp.ge.s32.totalorder %s35, 4
      %s45 = sphi 0, %s47
      %s48 = sphi 0, %s45
      %s49 = sphi 0, %s48
      %s65 = sphi 0, %s49
      %s71 = sphi 0, %s73
      %s74 = sphi 0, %s71
      %s75 = sphi 0, %s74
      %s91 = sphi 0, %s75
      %s95 = sphi 0, %s95
      %s97 = sphi 0, %s95
      %s98 = sphi 0, %s97
      %s112 = sphi 0, %s98
      %s116 = sphi 0, %s116
      %s118 = sphi 0, %s116
      %s119 = sphi 0, %s118
      %s133 = sphi 0, %s119
      %s137 = sphi 0, %s137
      %s139 = sphi 0, %s137
      %s140 = sphi 0, %s139
      %s154 = sphi 0, %s140
      %s158 = sphi 0, %s158
      %s160 = sphi 0, %s158
      %s161 = sphi 0, %s160
      %s175 = sphi 0, %s161
      %s179 = sphi 0, %s179
      %s181 = sphi 0, %s179
      %s182 = sphi 0, %s181
      %s196 = sphi 0, %s182
      %s200 = sphi 0, %s200
      %s202 = sphi 0, %s200
      %s203 = sphi 0, %s202
      %s217 = sphi 0, %s203
      %s221 = sphi 0, %s221
      %s223 = sphi 0, %s221
      %s224 = sphi 0, %s223
      %s238 = sphi 0, %s224
      %s242 = sphi 0, %s242
      %s244 = sphi 0, %s242
      %s245 = sphi 0, %s244
      %s259 = sphi 0, %s245
      %s263 = sphi 0, %s263
      %s265 = sphi 0, %s263
      %s266 = sphi 0, %s265
      %s280 = sphi 0, %s266
      %s284 = sphi 0, %s284
      %s286 = sphi 0, %s284
      %s287 = sphi 0, %s286
      %s301 = sphi 0, %s287
      %s307 = sphi 0, %s309
      %s310 = sphi 0, %s307
      %s311 = sphi 0, %s310
      %s327 = sphi 0, %s311
      %s333 = sphi 0, %s335
      %s336 = sphi 0, %s333
      %s337 = sphi 0, %s336
      %s353 = sphi 0, %s337
      %s359 = sphi 0, %s361
      %s362 = sphi 0, %s359
      %s363 = sphi 0, %s362
      %s379 = sphi 0, %s363
    $region4: #{tpu_custom_call.1} parent=1 // loop_header_branch
      %38 = sbr.rel (%p36) target = $region8
    $region5: #{tpu_custom_call.1} parent=1 // loop_body
      %s40 = ssub.s32 %s35, 1
      %s41 = ssub.s32 %s35, 2
      %s42 = sadd.s32 %s35, 1
      %s43 = ssub.s32 %s35, %s42
      %p44 = scmp.eq.s32.totalorder %s43, 0
      %s46 = sadd.s32 %s45, 1
      %s47 = scalar_select %p44, %s45, %s46
      %p50 = pneg %p44
      %p51 = scmp.eq.s32.totalorder %s35, 1
      %p52 = por %p50, %p51
      %p53 = scmp.ne.s32.totalorder %s45, %s48
      %p54 = scmp.eq.s32.totalorder %s35, 0
      %p55 = por %p53, %p54
      %p56 = scmp.ne.s32.totalorder %s45, %s48
      %p57 = scmp.eq.s32.totalorder %s40, 1
      %p58 = por %p56, %p57
      %p59 = scmp.ne.s32.totalorder %s48, %s49
      %p60 = scmp.eq.s32.totalorder %s40, 0
      %p61 = por %p59, %p60
      %p62 = scmp.ne.s32.totalorder %s48, %s49
      %p63 = scmp.eq.s32.totalorder %s41, 1
      %p64 = por %p62, %p63
      %p66 = scmp.ne.s32.totalorder %s49, %s65
      %p67 = scmp.eq.s32.totalorder %s41, 0
      %p68 = por %p66, %p67
      %s69 = ssub.s32 %s35, %s42
      %p70 = scmp.eq.s32.totalorder %s69, 0
      %s72 = sadd.s32 %s71, 1
      %s73 = scalar_select %p70, %s71, %s72
      %p76 = pneg %p70
      %p77 = scmp.eq.s32.totalorder %s35, 1
      %p78 = por %p76, %p77
      %p79 = scmp.ne.s32.totalorder %s71, %s74
      %p80 = scmp.eq.s32.totalorder %s35, 0
      %p81 = por %p79, %p80
      %p82 = scmp.ne.s32.totalorder %s71, %s74
      %p83 = scmp.eq.s32.totalorder %s40, 1
      %p84 = por %p82, %p83
      %p85 = scmp.ne.s32.totalorder %s74, %s75
      %p86 = scmp.eq.s32.totalorder %s40, 0
      %p87 = por %p85, %p86
      %p88 = scmp.ne.s32.totalorder %s74, %s75
      %p89 = scmp.eq.s32.totalorder %s41, 1
      %p90 = por %p88, %p89
      %p92 = scmp.ne.s32.totalorder %s75, %s91
      %p93 = scmp.eq.s32.totalorder %s41, 0
      %p94 = por %p92, %p93
      %s96 = sadd.s32 %s95, 1
      %p99 = scmp.eq.s32.totalorder %s35, 1
      %p100 = scmp.ne.s32.totalorder %s95, %s97
      %p101 = scmp.eq.s32.totalorder %s35, 0
      %p102 = por %p100, %p101
      %p103 = scmp.ne.s32.totalorder %s95, %s97
      %p104 = scmp.eq.s32.totalorder %s40, 1
      %p105 = por %p103, %p104
      %p106 = scmp.ne.s32.totalorder %s97, %s98
      %p107 = scmp.eq.s32.totalorder %s40, 0
      %p108 = por %p106, %p107
      %p109 = scmp.ne.s32.totalorder %s97, %s98
      %p110 = scmp.eq.s32.totalorder %s41, 1
      %p111 = por %p109, %p110
      %p113 = scmp.ne.s32.totalorder %s98, %s112
      %p114 = scmp.eq.s32.totalorder %s41, 0
      %p115 = por %p113, %p114
      %s117 = sadd.s32 %s116, 1
      %p120 = scmp.eq.s32.totalorder %s35, 1
      %p121 = scmp.ne.s32.totalorder %s116, %s118
      %p122 = scmp.eq.s32.totalorder %s35, 0
      %p123 = por %p121, %p122
      %p124 = scmp.ne.s32.totalorder %s116, %s118
      %p125 = scmp.eq.s32.totalorder %s40, 1
      %p126 = por %p124, %p125
      %p127 = scmp.ne.s32.totalorder %s118, %s119
      %p128 = scmp.eq.s32.totalorder %s40, 0
      %p129 = por %p127, %p128
      %p130 = scmp.ne.s32.totalorder %s118, %s119
      %p131 = scmp.eq.s32.totalorder %s41, 1
      %p132 = por %p130, %p131
      %p134 = scmp.ne.s32.totalorder %s119, %s133
      %p135 = scmp.eq.s32.totalorder %s41, 0
      %p136 = por %p134, %p135
      %s138 = sadd.s32 %s137, 1
      %p141 = scmp.eq.s32.totalorder %s35, 1
      %p142 = scmp.ne.s32.totalorder %s137, %s139
      %p143 = scmp.eq.s32.totalorder %s35, 0
      %p144 = por %p142, %p143
      %p145 = scmp.ne.s32.totalorder %s137, %s139
      %p146 = scmp.eq.s32.totalorder %s40, 1
      %p147 = por %p145, %p146
      %p148 = scmp.ne.s32.totalorder %s139, %s140
      %p149 = scmp.eq.s32.totalorder %s40, 0
      %p150 = por %p148, %p149
      %p151 = scmp.ne.s32.totalorder %s139, %s140
      %p152 = scmp.eq.s32.totalorder %s41, 1
      %p153 = por %p151, %p152
      %p155 = scmp.ne.s32.totalorder %s140, %s154
      %p156 = scmp.eq.s32.totalorder %s41, 0
      %p157 = por %p155, %p156
      %s159 = sadd.s32 %s158, 1
      %p162 = scmp.eq.s32.totalorder %s35, 1
      %p163 = scmp.ne.s32.totalorder %s158, %s160
      %p164 = scmp.eq.s32.totalorder %s35, 0
      %p165 = por %p163, %p164
      %p166 = scmp.ne.s32.totalorder %s158, %s160
      %p167 = scmp.eq.s32.totalorder %s40, 1
      %p168 = por %p166, %p167
      %p169 = scmp.ne.s32.totalorder %s160, %s161
      %p170 = scmp.eq.s32.totalorder %s40, 0
      %p171 = por %p169, %p170
      %p172 = scmp.ne.s32.totalorder %s160, %s161
      %p173 = scmp.eq.s32.totalorder %s41, 1
      %p174 = por %p172, %p173
      %p176 = scmp.ne.s32.totalorder %s161, %s175
      %p177 = scmp.eq.s32.totalorder %s41, 0
      %p178 = por %p176, %p177
      %s180 = sadd.s32 %s179, 1
      %p183 = scmp.eq.s32.totalorder %s35, 1
      %p184 = scmp.ne.s32.totalorder %s179, %s181
      %p185 = scmp.eq.s32.totalorder %s35, 0
      %p186 = por %p184, %p185
      %p187 = scmp.ne.s32.totalorder %s179, %s181
      %p188 = scmp.eq.s32.totalorder %s40, 1
      %p189 = por %p187, %p188
      %p190 = scmp.ne.s32.totalorder %s181, %s182
      %p191 = scmp.eq.s32.totalorder %s40, 0
      %p192 = por %p190, %p191
      %p193 = scmp.ne.s32.totalorder %s181, %s182
      %p194 = scmp.eq.s32.totalorder %s41, 1
      %p195 = por %p193, %p194
      %p197 = scmp.ne.s32.totalorder %s182, %s196
      %p198 = scmp.eq.s32.totalorder %s41, 0
      %p199 = por %p197, %p198
      %s201 = sadd.s32 %s200, 1
      %p204 = scmp.eq.s32.totalorder %s35, 1
      %p205 = scmp.ne.s32.totalorder %s200, %s202
      %p206 = scmp.eq.s32.totalorder %s35, 0
      %p207 = por %p205, %p206
      %p208 = scmp.ne.s32.totalorder %s200, %s202
      %p209 = scmp.eq.s32.totalorder %s40, 1
      %p210 = por %p208, %p209
      %p211 = scmp.ne.s32.totalorder %s202, %s203
      %p212 = scmp.eq.s32.totalorder %s40, 0
      %p213 = por %p211, %p212
      %p214 = scmp.ne.s32.totalorder %s202, %s203
      %p215 = scmp.eq.s32.totalorder %s41, 1
      %p216 = por %p214, %p215
      %p218 = scmp.ne.s32.totalorder %s203, %s217
      %p219 = scmp.eq.s32.totalorder %s41, 0
      %p220 = por %p218, %p219
      %s222 = sadd.s32 %s221, 1
      %p225 = scmp.eq.s32.totalorder %s35, 1
      %p226 = scmp.ne.s32.totalorder %s221, %s223
      %p227 = scmp.eq.s32.totalorder %s35, 0
      %p228 = por %p226, %p227
      %p229 = scmp.ne.s32.totalorder %s221, %s223
      %p230 = scmp.eq.s32.totalorder %s40, 1
      %p231 = por %p229, %p230
      %p232 = scmp.ne.s32.totalorder %s223, %s224
      %p233 = scmp.eq.s32.totalorder %s40, 0
      %p234 = por %p232, %p233
      %p235 = scmp.ne.s32.totalorder %s223, %s224
      %p236 = scmp.eq.s32.totalorder %s41, 1
      %p237 = por %p235, %p236
      %p239 = scmp.ne.s32.totalorder %s224, %s238
      %p240 = scmp.eq.s32.totalorder %s41, 0
      %p241 = por %p239, %p240
      %s243 = sadd.s32 %s242, 1
      %p246 = scmp.eq.s32.totalorder %s35, 1
      %p247 = scmp.ne.s32.totalorder %s242, %s244
      %p248 = scmp.eq.s32.totalorder %s35, 0
      %p249 = por %p247, %p248
      %p250 = scmp.ne.s32.totalorder %s242, %s244
      %p251 = scmp.eq.s32.totalorder %s40, 1
      %p252 = por %p250, %p251
      %p253 = scmp.ne.s32.totalorder %s244, %s245
      %p254 = scmp.eq.s32.totalorder %s40, 0
      %p255 = por %p253, %p254
      %p256 = scmp.ne.s32.totalorder %s244, %s245
      %p257 = scmp.eq.s32.totalorder %s41, 1
      %p258 = por %p256, %p257
      %p260 = scmp.ne.s32.totalorder %s245, %s259
      %p261 = scmp.eq.s32.totalorder %s41, 0
      %p262 = por %p260, %p261
      %s264 = sadd.s32 %s263, 1
      %p267 = scmp.eq.s32.totalorder %s35, 1
      %p268 = scmp.ne.s32.totalorder %s263, %s265
      %p269 = scmp.eq.s32.totalorder %s35, 0
      %p270 = por %p268, %p269
      %p271 = scmp.ne.s32.totalorder %s263, %s265
      %p272 = scmp.eq.s32.totalorder %s40, 1
      %p273 = por %p271, %p272
      %p274 = scmp.ne.s32.totalorder %s265, %s266
      %p275 = scmp.eq.s32.totalorder %s40, 0
      %p276 = por %p274, %p275
      %p277 = scmp.ne.s32.totalorder %s265, %s266
      %p278 = scmp.eq.s32.totalorder %s41, 1
      %p279 = por %p277, %p278
      %p281 = scmp.ne.s32.totalorder %s266, %s280
      %p282 = scmp.eq.s32.totalorder %s41, 0
      %p283 = por %p281, %p282
      %s285 = sadd.s32 %s284, 1
      %p288 = scmp.eq.s32.totalorder %s35, 1
      %p289 = scmp.ne.s32.totalorder %s284, %s286
      %p290 = scmp.eq.s32.totalorder %s35, 0
      %p291 = por %p289, %p290
      %p292 = scmp.ne.s32.totalorder %s284, %s286
      %p293 = scmp.eq.s32.totalorder %s40, 1
      %p294 = por %p292, %p293
      %p295 = scmp.ne.s32.totalorder %s286, %s287
      %p296 = scmp.eq.s32.totalorder %s40, 0
      %p297 = por %p295, %p296
      %p298 = scmp.ne.s32.totalorder %s286, %s287
      %p299 = scmp.eq.s32.totalorder %s41, 1
      %p300 = por %p298, %p299
      %p302 = scmp.ne.s32.totalorder %s287, %s301
      %p303 = scmp.eq.s32.totalorder %s41, 0
      %p304 = por %p302, %p303
      %s305 = ssub.s32 %s35, %s42
      %p306 = scmp.eq.s32.totalorder %s305, 0
      %s308 = sadd.s32 %s307, 1
      %s309 = scalar_select %p306, %s307, %s308
      %p312 = pneg %p306
      %p313 = scmp.eq.s32.totalorder %s35, 1
      %p314 = por %p312, %p313
      %p315 = scmp.ne.s32.totalorder %s307, %s310
      %p316 = scmp.eq.s32.totalorder %s35, 0
      %p317 = por %p315, %p316
      %p318 = scmp.ne.s32.totalorder %s307, %s310
      %p319 = scmp.eq.s32.totalorder %s40, 1
      %p320 = por %p318, %p319
      %p321 = scmp.ne.s32.totalorder %s310, %s311
      %p322 = scmp.eq.s32.totalorder %s40, 0
      %p323 = por %p321, %p322
      %p324 = scmp.ne.s32.totalorder %s310, %s311
      %p325 = scmp.eq.s32.totalorder %s41, 1
      %p326 = por %p324, %p325
      %p328 = scmp.ne.s32.totalorder %s311, %s327
      %p329 = scmp.eq.s32.totalorder %s41, 0
      %p330 = por %p328, %p329
      %s331 = ssub.s32 %s35, %s42
      %p332 = scmp.eq.s32.totalorder %s331, 0
      %s334 = sadd.s32 %s333, 1
      %s335 = scalar_select %p332, %s333, %s334
      %p338 = pneg %p332
      %p339 = scmp.eq.s32.totalorder %s35, 1
      %p340 = por %p338, %p339
      %p341 = scmp.ne.s32.totalorder %s333, %s336
      %p342 = scmp.eq.s32.totalorder %s35, 0
      %p343 = por %p341, %p342
      %p344 = scmp.ne.s32.totalorder %s333, %s336
      %p345 = scmp.eq.s32.totalorder %s40, 1
      %p346 = por %p344, %p345
      %p347 = scmp.ne.s32.totalorder %s336, %s337
      %p348 = scmp.eq.s32.totalorder %s40, 0
      %p349 = por %p347, %p348
      %p350 = scmp.ne.s32.totalorder %s336, %s337
      %p351 = scmp.eq.s32.totalorder %s41, 1
      %p352 = por %p350, %p351
      %p354 = scmp.ne.s32.totalorder %s337, %s353
      %p355 = scmp.eq.s32.totalorder %s41, 0
      %p356 = por %p354, %p355
      %s357 = ssub.s32 %s35, %s42
      %p358 = scmp.eq.s32.totalorder %s357, 0
      %s360 = sadd.s32 %s359, 1
      %s361 = scalar_select %p358, %s359, %s360
      %p364 = pneg %p358
      %p365 = scmp.eq.s32.totalorder %s35, 1
      %p366 = por %p364, %p365
      %p367 = scmp.ne.s32.totalorder %s359, %s362
      %p368 = scmp.eq.s32.totalorder %s35, 0
      %p369 = por %p367, %p368
      %p370 = scmp.ne.s32.totalorder %s359, %s362
      %p371 = scmp.eq.s32.totalorder %s40, 1
      %p372 = por %p370, %p371
      %p373 = scmp.ne.s32.totalorder %s362, %s363
      %p374 = scmp.eq.s32.totalorder %s40, 0
      %p375 = por %p373, %p374
      %p376 = scmp.ne.s32.totalorder %s362, %s363
      %p377 = scmp.eq.s32.totalorder %s41, 1
      %p378 = por %p376, %p377
      %p380 = scmp.ne.s32.totalorder %s363, %s379
      %p381 = scmp.eq.s32.totalorder %s41, 0
      %p382 = por %p380, %p381
      %p383 = scmp.le.s32.totalorder 1, %s35
      %p384 = scmp.lt.s32.totalorder %s35, 3
      %p385 = pnand %p383, %p384
      %p386 = pneg %p385
      // Predicated region
      $region9: #{tpu_custom_call.1} parent=5 // pred_check
        _
      $region10: #{tpu_custom_call.1} parent=5 // pred_check_branch
        %388 = sbr.rel (%p385) target = $region12
      $region11: #{tpu_custom_call.1} parent=5 // pred_region
        %s389 = ssub.s32 %s35, 1
        // Predicated region
        $region13: #{tpu_custom_call.1} parent=11 // pred_check
          %p390 = pneg %p108
        $region14: #{tpu_custom_call.1} parent=11 // pred_check_branch
          %392 = sbr.rel (%p390) target = $region16
        $region15: #{tpu_custom_call.1} parent=11 // pred_region
          %s394 = ssub.s32 2048, 2048
          %395 = vsyncadd [#allocation6], %s394
          %s396 = sshll.u32 [#allocation7], 4
          %s397 = int_to_ptr.vmem [resolvable:$true] %s396
          %402 = dma.hbm_to_vmem [thread:$0]  %s2, 2048, %s397, [#allocation6], 64, 64, 4
        $region16: #{tpu_custom_call.1} parent=11 // pred_fallthru
          _
        // Predicated region
        $region17: #{tpu_custom_call.1} parent=11 // pred_check
          %p403 = pneg %p129
        $region18: #{tpu_custom_call.1} parent=11 // pred_check_branch
          %405 = sbr.rel (%p403) target = $region20
        $region19: #{tpu_custom_call.1} parent=11 // pred_region
          _
        $region20: #{tpu_custom_call.1} parent=11 // pred_fallthru
          _
        // Predicated region
        $region21: #{tpu_custom_call.1} parent=11 // pred_check
          %p406 = pneg %p150
        $region22: #{tpu_custom_call.1} parent=11 // pred_check_branch
          %408 = sbr.rel (%p406) target = $region24
        $region23: #{tpu_custom_call.1} parent=11 // pred_region
          %s410 = ssub.s32 1024, 1024
          %411 = vsyncadd [#allocation9], %s410
          %s412 = sshll.u32 [#allocation8], 4
          %s413 = int_to_ptr.vmem [resolvable:$true] %s412
          %418 = dma.hbm_to_vmem [thread:$0]  %s4, 1024, %s413, [#allocation9], 64, 64, 4
        $region24: #{tpu_custom_call.1} parent=11 // pred_fallthru
          _
        // Predicated region
        $region25: #{tpu_custom_call.1} parent=11 // pred_check
          %p419 = pneg %p171
        $region26: #{tpu_custom_call.1} parent=11 // pred_check_branch
          %421 = sbr.rel (%p419) target = $region28
        $region27: #{tpu_custom_call.1} parent=11 // pred_region
          _
        $region28: #{tpu_custom_call.1} parent=11 // pred_fallthru
          _
        // Predicated region
        $region29: #{tpu_custom_call.1} parent=11 // pred_check
          %p422 = pneg %p192
        $region30: #{tpu_custom_call.1} parent=11 // pred_check_branch
          %424 = sbr.rel (%p422) target = $region32
        $region31: #{tpu_custom_call.1} parent=11 // pred_region
          %s426 = ssub.s32 2048, 2048
          %427 = vsyncadd [#allocation9], %s426
          %s428 = sshll.u32 [#allocation10], 4
          %s429 = int_to_ptr.vmem [resolvable:$true] %s428
          %434 = dma.hbm_to_vmem [thread:$0]  %s6, 2048, %s429, [#allocation9], 128, 128, 8
        $region32: #{tpu_custom_call.1} parent=11 // pred_fallthru
          _
        // Predicated region
        $region33: #{tpu_custom_call.1} parent=11 // pred_check
          %p435 = pneg %p213
        $region34: #{tpu_custom_call.1} parent=11 // pred_check_branch
          %437 = sbr.rel (%p435) target = $region36
        $region35: #{tpu_custom_call.1} parent=11 // pred_region
          _
        $region36: #{tpu_custom_call.1} parent=11 // pred_fallthru
          _
        // Predicated region
        $region37: #{tpu_custom_call.1} parent=11 // pred_check
          %p438 = pneg %p234
        $region38: #{tpu_custom_call.1} parent=11 // pred_check_branch
          %440 = sbr.rel (%p438) target = $region40
        $region39: #{tpu_custom_call.1} parent=11 // pred_region
          %s442 = ssub.s32 1024, 1024
          %443 = vsyncadd [#allocation12], %s442
          %s444 = sshll.u32 [#allocation11], 4
          %s445 = int_to_ptr.vmem [resolvable:$true] %s444
          %450 = dma.hbm_to_vmem [thread:$0]  %s8, 1024, %s445, [#allocation12], 64, 64, 4
        $region40: #{tpu_custom_call.1} parent=11 // pred_fallthru
          _
        // Predicated region
        $region41: #{tpu_custom_call.1} parent=11 // pred_check
          %p451 = pneg %p255
        $region42: #{tpu_custom_call.1} parent=11 // pred_check_branch
          %453 = sbr.rel (%p451) target = $region44
        $region43: #{tpu_custom_call.1} parent=11 // pred_region
          _
        $region44: #{tpu_custom_call.1} parent=11 // pred_fallthru
          _
        // Predicated region
        $region45: #{tpu_custom_call.1} parent=11 // pred_check
          %p454 = pneg %p276
        $region46: #{tpu_custom_call.1} parent=11 // pred_check_branch
          %456 = sbr.rel (%p454) target = $region48
        $region47: #{tpu_custom_call.1} parent=11 // pred_region
          %s458 = ssub.s32 2048, 2048
          %459 = vsyncadd [#allocation12], %s458
          %s460 = sshll.u32 [#allocation13], 4
          %s461 = int_to_ptr.vmem [resolvable:$true] %s460
          %466 = dma.hbm_to_vmem [thread:$0]  %s10, 2048, %s461, [#allocation12], 128, 128, 8
        $region48: #{tpu_custom_call.1} parent=11 // pred_fallthru
          _
        // Predicated region
        $region49: #{tpu_custom_call.1} parent=11 // pred_check
          %p467 = pneg %p297
        $region50: #{tpu_custom_call.1} parent=11 // pred_check_branch
          %469 = sbr.rel (%p467) target = $region52
        $region51: #{tpu_custom_call.1} parent=11 // pred_region
          _
        $region52: #{tpu_custom_call.1} parent=11 // pred_fallthru
          _
      $region12: #{tpu_custom_call.1} parent=5 // pred_fallthru
        _
      %p470 = scmp.lt.s32.totalorder %s35, 2
      // Predicated region
      $region53: #{tpu_custom_call.1} parent=5 // pred_check
        %p471 = pneg %p470
      $region54: #{tpu_custom_call.1} parent=5 // pred_check_branch
        %473 = sbr.rel (%p471) target = $region56
      $region55: #{tpu_custom_call.1} parent=5 // pred_region
        // Predicated region
        $region57: #{tpu_custom_call.1} parent=55 // pred_check
          %p474 = pneg %p55
        $region58: #{tpu_custom_call.1} parent=55 // pred_check_branch
          %476 = sbr.rel (%p474) target = $region60
        $region59: #{tpu_custom_call.1} parent=55 // pred_region
          %s477 = sand.u32 %s45, 1
          %s478 = scalar_lea.sflag [#allocation3], %s477
          %s479 = sand.u32 %s45, 1
          %s480 = smul.addr %s479, 128
          %s481 = scalar_lea.vmem [#allocation2], %s480
          %s482 = smul.u32 16, %s35
          %s484 = ssub.s32 2048, 2048
          %485 = vsyncadd %s478, %s484
          %s486 = smul.addr %s482, 2
          %s487 = smul.addr %s486, 64
          %s488 = scalar_lea.hbm %s0, %s487
          %s489 = sshll.u32 %s481, 4
          %s490 = int_to_ptr.vmem [resolvable:$true] %s489
          %495 = dma.hbm_to_vmem [thread:$0]  %s488, 2048, %s490, %s478, 128, 128, 8
        $region60: #{tpu_custom_call.1} parent=55 // pred_fallthru
          _
        // Predicated region
        $region61: #{tpu_custom_call.1} parent=55 // pred_check
          %p496 = pneg %p81
        $region62: #{tpu_custom_call.1} parent=55 // pred_check_branch
          %498 = sbr.rel (%p496) target = $region64
        $region63: #{tpu_custom_call.1} parent=55 // pred_region
          %s499 = sand.u32 %s35, 1
          %s500 = scalar_lea.sflag [#allocation6], %s499
          %s501 = sand.u32 %s71, 1
          %s502 = smul.addr %s501, 64
          %s503 = scalar_lea.vmem [#allocation5], %s502
          %s504 = smul.u32 16, %s35
          %s506 = ssub.s32 1024, 1024
          %507 = vsyncadd %s500, %s506
          %s508 = smul.addr %s504, 64
          %s509 = scalar_lea.hbm %s1, %s508
          %s510 = sshll.u32 %s503, 4
          %s511 = int_to_ptr.vmem [resolvable:$true] %s510
          %516 = dma.hbm_to_vmem [thread:$0]  %s509, 1024, %s511, %s500, 64, 64, 4
        $region64: #{tpu_custom_call.1} parent=55 // pred_fallthru
          _
      $region56: #{tpu_custom_call.1} parent=5 // pred_fallthru
        _
      %p517 = scmp.le.s32.totalorder 1, %s35
      %p518 = scmp.lt.s32.totalorder %s35, 3
      %p519 = pnand %p517, %p518
      %p520 = pneg %p519
      // Predicated region
      $region65: #{tpu_custom_call.1} parent=5 // pred_check
        _
      $region66: #{tpu_custom_call.1} parent=5 // pred_check_branch
        %522 = sbr.rel (%p519) target = $region68
      $region67: #{tpu_custom_call.1} parent=5 // pred_region
        %s523 = ssub.s32 %s35, 1
        %s524 = sand.u32 %s48, 1
        %s525 = scalar_lea.sflag [#allocation3], %s524
        %s526 = sand.u32 %s48, 1
        %s527 = smul.addr %s526, 128
        %s528 = scalar_lea.vmem [#allocation2], %s527
        // Predicated region
        $region69: #{tpu_custom_call.1} parent=67 // pred_check
          %p529 = pneg %p61
        $region70: #{tpu_custom_call.1} parent=67 // pred_check_branch
          %531 = sbr.rel (%p529) target = $region72
        $region71: #{tpu_custom_call.1} parent=67 // pred_region
          %532 = dma.done %s525, 2048
        $region72: #{tpu_custom_call.1} parent=67 // pred_fallthru
          _
        %s533 = sand.u32 %s40, 1
        %s534 = scalar_lea.sflag [#allocation6], %s533
        %s535 = sand.u32 %s74, 1
        %s536 = smul.addr %s535, 64
        %s537 = scalar_lea.vmem [#allocation5], %s536
        // Predicated region
        $region73: #{tpu_custom_call.1} parent=67 // pred_check
          %p538 = pneg %p87
        $region74: #{tpu_custom_call.1} parent=67 // pred_check_branch
          %540 = sbr.rel (%p538) target = $region76
        $region75: #{tpu_custom_call.1} parent=67 // pred_region
          %541 = dma.done %s534, 1024
        $region76: #{tpu_custom_call.1} parent=67 // pred_fallthru
          _
        // Predicated region
        $region77: #{tpu_custom_call.1} parent=67 // pred_check
          %p542 = pneg %p108
        $region78: #{tpu_custom_call.1} parent=67 // pred_check_branch
          %544 = sbr.rel (%p542) target = $region80
        $region79: #{tpu_custom_call.1} parent=67 // pred_region
          %545 = dma.done [#allocation6], 2048
        $region80: #{tpu_custom_call.1} parent=67 // pred_fallthru
          _
        // Predicated region
        $region81: #{tpu_custom_call.1} parent=67 // pred_check
          %p546 = pneg %p150
        $region82: #{tpu_custom_call.1} parent=67 // pred_check_branch
          %548 = sbr.rel (%p546) target = $region84
        $region83: #{tpu_custom_call.1} parent=67 // pred_region
          %549 = dma.done [#allocation9], 1024
        $region84: #{tpu_custom_call.1} parent=67 // pred_fallthru
          _
        // Predicated region
        $region85: #{tpu_custom_call.1} parent=67 // pred_check
          %p550 = pneg %p192
        $region86: #{tpu_custom_call.1} parent=67 // pred_check_branch
          %552 = sbr.rel (%p550) target = $region88
        $region87: #{tpu_custom_call.1} parent=67 // pred_region
          %553 = dma.done [#allocation9], 2048
        $region88: #{tpu_custom_call.1} parent=67 // pred_fallthru
          _
        // Predicated region
        $region89: #{tpu_custom_call.1} parent=67 // pred_check
          %p554 = pneg %p234
        $region90: #{tpu_custom_call.1} parent=67 // pred_check_branch
          %556 = sbr.rel (%p554) target = $region92
        $region91: #{tpu_custom_call.1} parent=67 // pred_region
          %557 = dma.done [#allocation12], 1024
        $region92: #{tpu_custom_call.1} parent=67 // pred_fallthru
          _
        // Predicated region
        $region93: #{tpu_custom_call.1} parent=67 // pred_check
          %p558 = pneg %p276
        $region94: #{tpu_custom_call.1} parent=67 // pred_check_branch
          %560 = sbr.rel (%p558) target = $region96
        $region95: #{tpu_custom_call.1} parent=67 // pred_region
          %561 = dma.done [#allocation12], 2048
        $region96: #{tpu_custom_call.1} parent=67 // pred_fallthru
          _
        %s562 = sand.u32 %s48, 1
        %s563 = scalar_lea.sflag [#allocation3], %s562
        %s564 = sand.u32 %s48, 1
        %s565 = smul.addr %s564, 128
        %s566 = scalar_lea.vmem [#allocation2], %s565
        %p567 = pneg %p61
        %p568 = pneg %p58
        %s569 = sand.u32 %s40, 1
        %s570 = scalar_lea.sflag [#allocation6], %s569
        %s571 = sand.u32 %s74, 1
        %s572 = smul.addr %s571, 64
        %s573 = scalar_lea.vmem [#allocation5], %s572
        %p574 = pneg %p87
        %p575 = pneg %p84
        %p576 = pneg %p108
        %p577 = pneg %p105
        %p578 = pneg %p129
        %p579 = pneg %p126
        %p580 = pneg %p150
        %p581 = pneg %p147
        %p582 = pneg %p171
        %p583 = pneg %p168
        %p584 = pneg %p192
        %p585 = pneg %p189
        %p586 = pneg %p213
        %p587 = pneg %p210
        %p588 = pneg %p234
        %p589 = pneg %p231
        %p590 = pneg %p255
        %p591 = pneg %p252
        %p592 = pneg %p276
        %p593 = pneg %p273
        %p594 = pneg %p297
        %p595 = pneg %p294
        %p596 = pneg %p323
        %p597 = pneg %p320
        %s598 = sand.u32 %s310, 1
        %s599 = scalar_lea.sflag [#allocation4], %s598
        %s600 = sand.u32 %s310, 1
        %s601 = smul.addr %s600, 256
        %s602 = scalar_lea.vmem [#allocation14], %s601
        %p603 = pneg %p349
        %p604 = pneg %p346
        %s605 = sand.u32 %s40, 1
        %s606 = scalar_lea.sflag [#allocation16], %s605
        %s607 = sand.u32 %s336, 1
        %s608 = smul.addr %s607, 128
        %s609 = scalar_lea.vmem [#allocation15], %s608
        %p610 = pneg %p375
        %p611 = pneg %p372
        %s612 = sand.u32 %s40, 1
        %s613 = scalar_lea.sflag [#allocation16], %s612
        %s614 = sand.u32 %s362, 1
        %s615 = smul.addr %s614, 128
        %s616 = scalar_lea.vmem [#allocation17], %s615
        %s617 = smul.u32 16, %s40
        %s618 = smul.u32 16, %s40
        %s619 = smul.u32 16, %s40
        %s620 = smul.u32 16, %s40
        %s621 = smul.u32 16, %s40
        %v623 = vld [vmem:[%s528] sm:$0xff]
        %v624 = vld [vmem:[%s528 + $0x8] sm:$0xff]
        %v625 = vld [vmem:[%s528 + $0x10] sm:$0xff]
        %v626 = vld [vmem:[%s528 + $0x18] sm:$0xff]
        %v627 = vld [vmem:[%s528 + $0x20] sm:$0xff]
        %v628 = vld [vmem:[%s528 + $0x28] sm:$0xff]
        %v629 = vld [vmem:[%s528 + $0x30] sm:$0xff]
        %v630 = vld [vmem:[%s528 + $0x38] sm:$0xff]
        %v631 = vld [vmem:[%s528 + $0x40] sm:$0xff]
        %v632 = vld [vmem:[%s528 + $0x48] sm:$0xff]
        %v633 = vld [vmem:[%s528 + $0x50] sm:$0xff]
        %v634 = vld [vmem:[%s528 + $0x58] sm:$0xff]
        %v635 = vld [vmem:[%s528 + $0x60] sm:$0xff]
        %v636 = vld [vmem:[%s528 + $0x68] sm:$0xff]
        %v637 = vld [vmem:[%s528 + $0x70] sm:$0xff]
        %v638 = vld [vmem:[%s528 + $0x78] sm:$0xff]
        %v639 = vld [vmem:[#allocation7] sm:$0xf]
        %v640 = vld [vmem:[#allocation7 + $0x4] sm:$0xf]
        %v641 = vld [vmem:[#allocation7 + $0x8] sm:$0xf]
        %v642 = vld [vmem:[#allocation7 + $0xc] sm:$0xf]
        %v643 = vld [vmem:[#allocation7 + $0x10] sm:$0xf]
        %v644 = vld [vmem:[#allocation7 + $0x14] sm:$0xf]
        %v645 = vld [vmem:[#allocation7 + $0x18] sm:$0xf]
        %v646 = vld [vmem:[#allocation7 + $0x1c] sm:$0xf]
        %v647 = vld [vmem:[#allocation7 + $0x20] sm:$0xf]
        %v648 = vld [vmem:[#allocation7 + $0x24] sm:$0xf]
        %v649 = vld [vmem:[#allocation7 + $0x28] sm:$0xf]
        %v650 = vld [vmem:[#allocation7 + $0x2c] sm:$0xf]
        %v651 = vld [vmem:[#allocation7 + $0x30] sm:$0xf]
        %v652 = vld [vmem:[#allocation7 + $0x34] sm:$0xf]
        %v653 = vld [vmem:[#allocation7 + $0x38] sm:$0xf]
        %v654 = vld [vmem:[#allocation7 + $0x3c] sm:$0xf]
        %v655 = vld [vmem:[#allocation7 + $0x40] sm:$0xf]
        %v656 = vld [vmem:[#allocation7 + $0x44] sm:$0xf]
        %v657 = vld [vmem:[#allocation7 + $0x48] sm:$0xf]
        %v658 = vld [vmem:[#allocation7 + $0x4c] sm:$0xf]
        %v659 = vld [vmem:[#allocation7 + $0x50] sm:$0xf]
        %v660 = vld [vmem:[#allocation7 + $0x54] sm:$0xf]
        %v661 = vld [vmem:[#allocation7 + $0x58] sm:$0xf]
        %v662 = vld [vmem:[#allocation7 + $0x5c] sm:$0xf]
        %v663 = vld [vmem:[#allocation7 + $0x60] sm:$0xf]
        %v664 = vld [vmem:[#allocation7 + $0x64] sm:$0xf]
        %v665 = vld [vmem:[#allocation7 + $0x68] sm:$0xf]
        %v666 = vld [vmem:[#allocation7 + $0x6c] sm:$0xf]
        %v667 = vld [vmem:[#allocation7 + $0x70] sm:$0xf]
        %v668 = vld [vmem:[#allocation7 + $0x74] sm:$0xf]
        %v669 = vld [vmem:[#allocation7 + $0x78] sm:$0xf]
        %v670 = vld [vmem:[#allocation7 + $0x7c] sm:$0xf]
        %v671 = vld [vmem:[%s3] sm:$0x1]
        %v673 = vlaneseq
        %v674 = vshrl.u32 %v673, 7
        %v675 = vsub.s32 0, %v674
        %v676 = vrot.slane %v671, %v675
        %v694 = vunpack.c.l.b16 %v623
        %v695 = vunpack.c.h.b16 %v623
        %v696 = vunpack.c.l.b16 %v624
        %v697 = vunpack.c.h.b16 %v624
        %v698 = vunpack.c.l.b16 %v625
        %v699 = vunpack.c.h.b16 %v625
        %v700 = vunpack.c.l.b16 %v626
        %v701 = vunpack.c.h.b16 %v626
        %v702 = vunpack.c.l.b16 %v627
        %v703 = vunpack.c.h.b16 %v627
        %v704 = vunpack.c.l.b16 %v628
        %v705 = vunpack.c.h.b16 %v628
        %v706 = vunpack.c.l.b16 %v629
        %v707 = vunpack.c.h.b16 %v629
        %v708 = vunpack.c.l.b16 %v630
        %v709 = vunpack.c.h.b16 %v630
        %v710 = vunpack.c.l.b16 %v631
        %v711 = vunpack.c.h.b16 %v631
        %v712 = vunpack.c.l.b16 %v632
        %v713 = vunpack.c.h.b16 %v632
        %v714 = vunpack.c.l.b16 %v633
        %v715 = vunpack.c.h.b16 %v633
        %v716 = vunpack.c.l.b16 %v634
        %v717 = vunpack.c.h.b16 %v634
        %v718 = vunpack.c.l.b16 %v635
        %v719 = vunpack.c.h.b16 %v635
        %v720 = vunpack.c.l.b16 %v636
        %v721 = vunpack.c.h.b16 %v636
        %v722 = vunpack.c.l.b16 %v637
        %v723 = vunpack.c.h.b16 %v637
        %v724 = vunpack.c.l.b16 %v638
        %v725 = vunpack.c.h.b16 %v638
        %v726 = vpack.c.b16 %v696, %v694
        %v727 = vpack.c.b16 %v697, %v695
        %v728 = vpack.c.b16 %v700, %v698
        %v729 = vpack.c.b16 %v701, %v699
        %v730 = vpack.c.b16 %v704, %v702
        %v731 = vpack.c.b16 %v705, %v703
        %v732 = vpack.c.b16 %v708, %v706
        %v733 = vpack.c.b16 %v709, %v707
        %v734 = vpack.c.b16 %v712, %v710
        %v735 = vpack.c.b16 %v713, %v711
        %v736 = vpack.c.b16 %v716, %v714
        %v737 = vpack.c.b16 %v717, %v715
        %v738 = vpack.c.b16 %v720, %v718
        %v739 = vpack.c.b16 %v721, %v719
        %v740 = vpack.c.b16 %v724, %v722
        %v741 = vpack.c.b16 %v725, %v723
        %v790 = vunpack.c.l.b16 %v639
        %v791 = vunpack.c.l.b16 %v640
        %v792 = vunpack.c.l.b16 %v641
        %v793 = vunpack.c.l.b16 %v642
        %v794 = vunpack.c.l.b16 %v643
        %v795 = vunpack.c.l.b16 %v644
        %v796 = vunpack.c.l.b16 %v645
        %v797 = vunpack.c.l.b16 %v646
        %v798 = vunpack.c.l.b16 %v647
        %v799 = vunpack.c.l.b16 %v648
        %v800 = vunpack.c.l.b16 %v649
        %v801 = vunpack.c.l.b16 %v650
        %v802 = vunpack.c.l.b16 %v651
        %v803 = vunpack.c.l.b16 %v652
        %v804 = vunpack.c.l.b16 %v653
        %v805 = vunpack.c.l.b16 %v654
        %v806 = vunpack.c.l.b16 %v655
        %v807 = vunpack.c.l.b16 %v656
        %v808 = vunpack.c.l.b16 %v657
        %v809 = vunpack.c.l.b16 %v658
        %v810 = vunpack.c.l.b16 %v659
        %v811 = vunpack.c.l.b16 %v660
        %v812 = vunpack.c.l.b16 %v661
        %v813 = vunpack.c.l.b16 %v662
        %v814 = vunpack.c.l.b16 %v663
        %v815 = vunpack.c.l.b16 %v664
        %v816 = vunpack.c.l.b16 %v665
        %v817 = vunpack.c.l.b16 %v666
        %v818 = vunpack.c.l.b16 %v667
        %v819 = vunpack.c.l.b16 %v668
        %v820 = vunpack.c.l.b16 %v669
        %v821 = vunpack.c.l.b16 %v670
        %v822 = vpack.c.b16 %v791, %v790
        %v823 = vpack.c.b16 %v793, %v792
        %v824 = vpack.c.b16 %v795, %v794
        %v825 = vpack.c.b16 %v797, %v796
        %v826 = vpack.c.b16 %v799, %v798
        %v827 = vpack.c.b16 %v801, %v800
        %v828 = vpack.c.b16 %v803, %v802
        %v829 = vpack.c.b16 %v805, %v804
        %v830 = vpack.c.b16 %v807, %v806
        %v831 = vpack.c.b16 %v809, %v808
        %v832 = vpack.c.b16 %v811, %v810
        %v833 = vpack.c.b16 %v813, %v812
        %v834 = vpack.c.b16 %v815, %v814
        %v835 = vpack.c.b16 %v817, %v816
        %v836 = vpack.c.b16 %v819, %v818
        %v837 = vpack.c.b16 %v821, %v820
        %854 = vmatprep.subr.bf16.mxu0 0
        %855 = vmatpush1.bf16.msra.mxu0 %v829
        %856 = vmatprep.subr.bf16.mxu0 0
        %857 = vmatpush1.bf16.msra.mxu0 %v828
        %858 = vmatprep.subr.bf16.mxu0 0
        %859 = vmatpush1.bf16.msra.mxu0 %v827
        %860 = vmatprep.subr.bf16.mxu0 0
        %861 = vmatpush1.bf16.msra.mxu0 %v826
        %862 = vmatprep.subr.bf16.mxu0 0
        %863 = vmatpush1.bf16.msra.mxu0 %v825
        %864 = vmatprep.subr.bf16.mxu0 0
        %865 = vmatpush1.bf16.msra.mxu0 %v824
        %866 = vmatprep.subr.bf16.mxu0 0
        %867 = vmatpush1.bf16.msra.mxu0 %v823
        %868 = vmatprep.subr.bf16.mxu0 0
        %869 = vmatpush1.bf16.msra.mxu0 %v822
        %870 = vmatprep.subr.bf16.mxu0 0
        %871 = vmatpush2.bf16.msra.mxu0 %v837
        %872 = vmatprep.subr.bf16.mxu0 0
        %873 = vmatpush2.bf16.msra.mxu0 %v836
        %874 = vmatprep.subr.bf16.mxu0 0
        %875 = vmatpush2.bf16.msra.mxu0 %v835
        %876 = vmatprep.subr.bf16.mxu0 0
        %877 = vmatpush2.bf16.msra.mxu0 %v834
        %878 = vmatprep.subr.bf16.mxu0 0
        %879 = vmatpush2.bf16.msra.mxu0 %v833
        %880 = vmatprep.subr.bf16.mxu0 0
        %881 = vmatpush2.bf16.msra.mxu0 %v832
        %882 = vmatprep.subr.bf16.mxu0 0
        %883 = vmatpush2.bf16.msra.mxu0 %v831
        %884 = vmatprep.subr.bf16.mxu0 0
        %885 = vmatpush2.bf16.msra.mxu0 %v830
        %886 = vmatprep.mubr.bf16.mxu0 %v727
        %887 = vmatmul.mubr.bf16.gmra.mxu0 %v726
        %v888 = vpop.f32.mrf.mxu0
        %v889 = vadd.f32 %v676, %v888
        %v890 = vpop.f32.mrf.mxu0
        %v891 = vpop.f32.mrf.mxu0
        %v892 = vadd.f32 %v676, %v891
        %v893 = vpop.f32.mrf.mxu0
        %894 = vmatprep.mubr.bf16.mxu0 %v729
        %895 = vmatmul.mubr.bf16.gmra.mxu0 %v728
        %v896 = vpop.f32.mrf.mxu0
        %v897 = vadd.f32 %v676, %v896
        %v898 = vpop.f32.mrf.mxu0
        %v899 = vpop.f32.mrf.mxu0
        %v900 = vadd.f32 %v676, %v899
        %v901 = vpop.f32.mrf.mxu0
        %902 = vmatprep.mubr.bf16.mxu0 %v731
        %903 = vmatmul.mubr.bf16.gmra.mxu0 %v730
        %v904 = vpop.f32.mrf.mxu0
        %v905 = vadd.f32 %v676, %v904
        %v906 = vpop.f32.mrf.mxu0
        %v907 = vpop.f32.mrf.mxu0
        %v908 = vadd.f32 %v676, %v907
        %v909 = vpop.f32.mrf.mxu0
        %910 = vmatprep.mubr.bf16.mxu0 %v733
        %911 = vmatmul.mubr.bf16.gmra.mxu0 %v732
        %v912 = vpop.f32.mrf.mxu0
        %v913 = vadd.f32 %v676, %v912
        %v914 = vpop.f32.mrf.mxu0
        %v915 = vpop.f32.mrf.mxu0
        %v916 = vadd.f32 %v676, %v915
        %v917 = vpop.f32.mrf.mxu0
        %918 = vmatprep.mubr.bf16.mxu0 %v735
        %919 = vmatmul.mubr.bf16.gmra.mxu0 %v734
        %v920 = vpop.f32.mrf.mxu0
        %v921 = vadd.f32 %v676, %v920
        %v922 = vpop.f32.mrf.mxu0
        %v923 = vpop.f32.mrf.mxu0
        %v924 = vadd.f32 %v676, %v923
        %v925 = vpop.f32.mrf.mxu0
        %926 = vmatprep.mubr.bf16.mxu0 %v737
        %927 = vmatmul.mubr.bf16.gmra.mxu0 %v736
        %v928 = vpop.f32.mrf.mxu0
        %v929 = vadd.f32 %v676, %v928
        %v930 = vpop.f32.mrf.mxu0
        %v931 = vpop.f32.mrf.mxu0
        %v932 = vadd.f32 %v676, %v931
        %v933 = vpop.f32.mrf.mxu0
        %934 = vmatprep.mubr.bf16.mxu0 %v739
        %935 = vmatmul.mubr.bf16.gmra.mxu0 %v738
        %v936 = vpop.f32.mrf.mxu0
        %v937 = vadd.f32 %v676, %v936
        %v938 = vpop.f32.mrf.mxu0
        %v939 = vpop.f32.mrf.mxu0
        %v940 = vadd.f32 %v676, %v939
        %v941 = vpop.f32.mrf.mxu0
        %942 = vmatprep.mubr.bf16.mxu0 %v741
        %943 = vmatmul.mubr.bf16.gmra.mxu0 %v740
        %v944 = vpop.f32.mrf.mxu0
        %v945 = vadd.f32 %v676, %v944
        %v946 = vpop.f32.mrf.mxu0
        %v947 = vpop.f32.mrf.mxu0
        %v948 = vadd.f32 %v676, %v947
        %v949 = vpop.f32.mrf.mxu0
        %950 = vdwg.mxu0
        %v951 = vmax.f32 %v889, 0.0
        %v952 = vmax.f32 %v892, 0.0
        %v953 = vmax.f32 %v897, 0.0
        %v954 = vmax.f32 %v900, 0.0
        %v955 = vmax.f32 %v905, 0.0
        %v956 = vmax.f32 %v908, 0.0
        %v957 = vmax.f32 %v913, 0.0
        %v958 = vmax.f32 %v916, 0.0
        %v959 = vmax.f32 %v921, 0.0
        %v960 = vmax.f32 %v924, 0.0
        %v961 = vmax.f32 %v929, 0.0
        %v962 = vmax.f32 %v932, 0.0
        %v963 = vmax.f32 %v937, 0.0
        %v964 = vmax.f32 %v940, 0.0
        %v965 = vmax.f32 %v945, 0.0
        %v966 = vmax.f32 %v948, 0.0
        %v967 = vpack.c.bf16 %v952, %v951
        %v968 = vpack.c.bf16 %v954, %v953
        %v969 = vpack.c.bf16 %v956, %v955
        %v970 = vpack.c.bf16 %v958, %v957
        %v971 = vpack.c.bf16 %v960, %v959
        %v972 = vpack.c.bf16 %v962, %v961
        %v973 = vpack.c.bf16 %v964, %v963
        %v974 = vpack.c.bf16 %v966, %v965
        %v975 = vld [vmem:[#allocation8] sm:$0xf]
        %v976 = vld [vmem:[#allocation8 + $0x4] sm:$0xf]
        %v977 = vld [vmem:[#allocation8 + $0x8] sm:$0xf]
        %v978 = vld [vmem:[#allocation8 + $0xc] sm:$0xf]
        %v979 = vld [vmem:[#allocation8 + $0x10] sm:$0xf]
        %v980 = vld [vmem:[#allocation8 + $0x14] sm:$0xf]
        %v981 = vld [vmem:[#allocation8 + $0x18] sm:$0xf]
        %v982 = vld [vmem:[#allocation8 + $0x1c] sm:$0xf]
        %v983 = vld [vmem:[#allocation8 + $0x20] sm:$0xf]
        %v984 = vld [vmem:[#allocation8 + $0x24] sm:$0xf]
        %v985 = vld [vmem:[#allocation8 + $0x28] sm:$0xf]
        %v986 = vld [vmem:[#allocation8 + $0x2c] sm:$0xf]
        %v987 = vld [vmem:[#allocation8 + $0x30] sm:$0xf]
        %v988 = vld [vmem:[#allocation8 + $0x34] sm:$0xf]
        %v989 = vld [vmem:[#allocation8 + $0x38] sm:$0xf]
        %v990 = vld [vmem:[#allocation8 + $0x3c] sm:$0xf]
        %v991 = vld [vmem:[%s5] sm:$0x1]
        %v993 = vlaneseq
        %v994 = vshrl.u32 %v993, 7
        %v995 = vsub.s32 0, %v994
        %v996 = vrot.slane %v991, %v995
        %v1014 = vunpack.c.l.b16 %v975
        %v1015 = vunpack.c.l.b16 %v976
        %v1016 = vunpack.c.l.b16 %v977
        %v1017 = vunpack.c.l.b16 %v978
        %v1018 = vunpack.c.l.b16 %v979
        %v1019 = vunpack.c.l.b16 %v980
        %v1020 = vunpack.c.l.b16 %v981
        %v1021 = vunpack.c.l.b16 %v982
        %v1022 = vunpack.c.l.b16 %v983
        %v1023 = vunpack.c.l.b16 %v984
        %v1024 = vunpack.c.l.b16 %v985
        %v1025 = vunpack.c.l.b16 %v986
        %v1026 = vunpack.c.l.b16 %v987
        %v1027 = vunpack.c.l.b16 %v988
        %v1028 = vunpack.c.l.b16 %v989
        %v1029 = vunpack.c.l.b16 %v990
        %v1030 = vpack.c.b16 %v1015, %v1014
        %v1031 = vpack.c.b16 %v1017, %v1016
        %v1032 = vpack.c.b16 %v1019, %v1018
        %v1033 = vpack.c.b16 %v1021, %v1020
        %v1034 = vpack.c.b16 %v1023, %v1022
        %v1035 = vpack.c.b16 %v1025, %v1024
        %v1036 = vpack.c.b16 %v1027, %v1026
        %v1037 = vpack.c.b16 %v1029, %v1028
        %1046 = vmatprep.subr.bf16.mxu0 0
        %1047 = vmatpush1.bf16.msra.mxu0 %v1037
        %1048 = vmatprep.subr.bf16.mxu0 0
        %1049 = vmatpush1.bf16.msra.mxu0 %v1036
        %1050 = vmatprep.subr.bf16.mxu0 0
        %1051 = vmatpush1.bf16.msra.mxu0 %v1035
        %1052 = vmatprep.subr.bf16.mxu0 0
        %1053 = vmatpush1.bf16.msra.mxu0 %v1034
        %1054 = vmatprep.subr.bf16.mxu0 0
        %1055 = vmatpush1.bf16.msra.mxu0 %v1033
        %1056 = vmatprep.subr.bf16.mxu0 0
        %1057 = vmatpush1.bf16.msra.mxu0 %v1032
        %1058 = vmatprep.subr.bf16.mxu0 0
        %1059 = vmatpush1.bf16.msra.mxu0 %v1031
        %1060 = vmatprep.subr.bf16.mxu0 0
        %1061 = vmatpush1.bf16.msra.mxu0 %v1030
        %1062 = vmatprep.subr.bf16.mxu0 0
        %1063 = vmatpush2.bf16.msra.mxu0 0
        %1064 = vmatprep.subr.bf16.mxu0 0
        %1065 = vmatpush2.bf16.msra.mxu0 0
        %1066 = vmatprep.subr.bf16.mxu0 0
        %1067 = vmatpush2.bf16.msra.mxu0 0
        %1068 = vmatprep.subr.bf16.mxu0 0
        %1069 = vmatpush2.bf16.msra.mxu0 0
        %1070 = vmatprep.subr.bf16.mxu0 0
        %1071 = vmatpush2.bf16.msra.mxu0 0
        %1072 = vmatprep.subr.bf16.mxu0 0
        %1073 = vmatpush2.bf16.msra.mxu0 0
        %1074 = vmatprep.subr.bf16.mxu0 0
        %1075 = vmatpush2.bf16.msra.mxu0 0
        %1076 = vmatprep.subr.bf16.mxu0 0
        %1077 = vmatpush2.bf16.msra.mxu0 0
        %1078 = vmatprep.mubr.bf16.mxu0 0
        %1079 = vmatmul.mubr.bf16.gmra.mxu0 %v967
        %v1080 = vpop.f32.mrf.mxu0
        %v1081 = vadd.f32 %v996, %v1080
        %v1082 = vpop.f32.mrf.mxu0
        %v1083 = vpop.f32.mrf.mxu0
        %v1084 = vadd.f32 %v996, %v1083
        %v1085 = vpop.f32.mrf.mxu0
        %1086 = vmatprep.mubr.bf16.mxu0 0
        %1087 = vmatmul.mubr.bf16.gmra.mxu0 %v968
        %v1088 = vpop.f32.mrf.mxu0
        %v1089 = vadd.f32 %v996, %v1088
        %v1090 = vpop.f32.mrf.mxu0
        %v1091 = vpop.f32.mrf.mxu0
        %v1092 = vadd.f32 %v996, %v1091
        %v1093 = vpop.f32.mrf.mxu0
        %1094 = vmatprep.mubr.bf16.mxu0 0
        %1095 = vmatmul.mubr.bf16.gmra.mxu0 %v969
        %v1096 = vpop.f32.mrf.mxu0
        %v1097 = vadd.f32 %v996, %v1096
        %v1098 = vpop.f32.mrf.mxu0
        %v1099 = vpop.f32.mrf.mxu0
        %v1100 = vadd.f32 %v996, %v1099
        %v1101 = vpop.f32.mrf.mxu0
        %1102 = vmatprep.mubr.bf16.mxu0 0
        %1103 = vmatmul.mubr.bf16.gmra.mxu0 %v970
        %v1104 = vpop.f32.mrf.mxu0
        %v1105 = vadd.f32 %v996, %v1104
        %v1106 = vpop.f32.mrf.mxu0
        %v1107 = vpop.f32.mrf.mxu0
        %v1108 = vadd.f32 %v996, %v1107
        %v1109 = vpop.f32.mrf.mxu0
        %1110 = vmatprep.mubr.bf16.mxu0 0
        %1111 = vmatmul.mubr.bf16.gmra.mxu0 %v971
        %v1112 = vpop.f32.mrf.mxu0
        %v1113 = vadd.f32 %v996, %v1112
        %v1114 = vpop.f32.mrf.mxu0
        %v1115 = vpop.f32.mrf.mxu0
        %v1116 = vadd.f32 %v996, %v1115
        %v1117 = vpop.f32.mrf.mxu0
        %1118 = vmatprep.mubr.bf16.mxu0 0
        %1119 = vmatmul.mubr.bf16.gmra.mxu0 %v972
        %v1120 = vpop.f32.mrf.mxu0
        %v1121 = vadd.f32 %v996, %v1120
        %v1122 = vpop.f32.mrf.mxu0
        %v1123 = vpop.f32.mrf.mxu0
        %v1124 = vadd.f32 %v996, %v1123
        %v1125 = vpop.f32.mrf.mxu0
        %1126 = vmatprep.mubr.bf16.mxu0 0
        %1127 = vmatmul.mubr.bf16.gmra.mxu0 %v973
        %v1128 = vpop.f32.mrf.mxu0
        %v1129 = vadd.f32 %v996, %v1128
        %v1130 = vpop.f32.mrf.mxu0
        %v1131 = vpop.f32.mrf.mxu0
        %v1132 = vadd.f32 %v996, %v1131
        %v1133 = vpop.f32.mrf.mxu0
        %1134 = vmatprep.mubr.bf16.mxu0 0
        %1135 = vmatmul.mubr.bf16.gmra.mxu0 %v974
        %v1136 = vpop.f32.mrf.mxu0
        %v1137 = vadd.f32 %v996, %v1136
        %v1138 = vpop.f32.mrf.mxu0
        %v1139 = vpop.f32.mrf.mxu0
        %v1140 = vadd.f32 %v996, %v1139
        %v1141 = vpop.f32.mrf.mxu0
        %1142 = vdwg.mxu0
        %v1143 = vmax.f32 %v1081, 0.0
        %v1144 = vmax.f32 %v1084, 0.0
        %v1145 = vmax.f32 %v1089, 0.0
        %v1146 = vmax.f32 %v1092, 0.0
        %v1147 = vmax.f32 %v1097, 0.0
        %v1148 = vmax.f32 %v1100, 0.0
        %v1149 = vmax.f32 %v1105, 0.0
        %v1150 = vmax.f32 %v1108, 0.0
        %v1151 = vmax.f32 %v1113, 0.0
        %v1152 = vmax.f32 %v1116, 0.0
        %v1153 = vmax.f32 %v1121, 0.0
        %v1154 = vmax.f32 %v1124, 0.0
        %v1155 = vmax.f32 %v1129, 0.0
        %v1156 = vmax.f32 %v1132, 0.0
        %v1157 = vmax.f32 %v1137, 0.0
        %v1158 = vmax.f32 %v1140, 0.0
        %v1159 = vpack.c.bf16 %v1144, %v1143
        %v1160 = vpack.c.bf16 %v1146, %v1145
        %v1161 = vpack.c.bf16 %v1148, %v1147
        %v1162 = vpack.c.bf16 %v1150, %v1149
        %v1163 = vpack.c.bf16 %v1152, %v1151
        %v1164 = vpack.c.bf16 %v1154, %v1153
        %v1165 = vpack.c.bf16 %v1156, %v1155
        %v1166 = vpack.c.bf16 %v1158, %v1157
        %v1167 = vld [vmem:[#allocation10] sm:$0xff]
        %v1168 = vld [vmem:[#allocation10 + $0x8] sm:$0xff]
        %v1169 = vld [vmem:[#allocation10 + $0x10] sm:$0xff]
        %v1170 = vld [vmem:[#allocation10 + $0x18] sm:$0xff]
        %v1171 = vld [vmem:[#allocation10 + $0x20] sm:$0xff]
        %v1172 = vld [vmem:[#allocation10 + $0x28] sm:$0xff]
        %v1173 = vld [vmem:[#allocation10 + $0x30] sm:$0xff]
        %v1174 = vld [vmem:[#allocation10 + $0x38] sm:$0xff]
        %v1175 = vld [vmem:[#allocation10 + $0x40] sm:$0xff]
        %v1176 = vld [vmem:[#allocation10 + $0x48] sm:$0xff]
        %v1177 = vld [vmem:[#allocation10 + $0x50] sm:$0xff]
        %v1178 = vld [vmem:[#allocation10 + $0x58] sm:$0xff]
        %v1179 = vld [vmem:[#allocation10 + $0x60] sm:$0xff]
        %v1180 = vld [vmem:[#allocation10 + $0x68] sm:$0xff]
        %v1181 = vld [vmem:[#allocation10 + $0x70] sm:$0xff]
        %v1182 = vld [vmem:[#allocation10 + $0x78] sm:$0xff]
        %v1183 = vld [vmem:[%s7] sm:$0x3]
        %v1185 = vlaneseq
        %v1186 = vshrl.u32 %v1185, 7
        %v1187 = vsub.s32 0, %v1186
        %v1188 = vrot.slane %v1183, %v1187
        %v1189 = vlaneseq
        %v1190 = vshrl.u32 %v1189, 7
        %v1191 = vsub.s32 1, %v1190
        %v1192 = vrot.slane %v1183, %v1191
        %v1211 = vunpack.c.l.b16 %v1167
        %v1212 = vunpack.c.h.b16 %v1167
        %v1213 = vunpack.c.l.b16 %v1168
        %v1214 = vunpack.c.h.b16 %v1168
        %v1215 = vunpack.c.l.b16 %v1169
        %v1216 = vunpack.c.h.b16 %v1169
        %v1217 = vunpack.c.l.b16 %v1170
        %v1218 = vunpack.c.h.b16 %v1170
        %v1219 = vunpack.c.l.b16 %v1171
        %v1220 = vunpack.c.h.b16 %v1171
        %v1221 = vunpack.c.l.b16 %v1172
        %v1222 = vunpack.c.h.b16 %v1172
        %v1223 = vunpack.c.l.b16 %v1173
        %v1224 = vunpack.c.h.b16 %v1173
        %v1225 = vunpack.c.l.b16 %v1174
        %v1226 = vunpack.c.h.b16 %v1174
        %v1227 = vunpack.c.l.b16 %v1175
        %v1228 = vunpack.c.h.b16 %v1175
        %v1229 = vunpack.c.l.b16 %v1176
        %v1230 = vunpack.c.h.b16 %v1176
        %v1231 = vunpack.c.l.b16 %v1177
        %v1232 = vunpack.c.h.b16 %v1177
        %v1233 = vunpack.c.l.b16 %v1178
        %v1234 = vunpack.c.h.b16 %v1178
        %v1235 = vunpack.c.l.b16 %v1179
        %v1236 = vunpack.c.h.b16 %v1179
        %v1237 = vunpack.c.l.b16 %v1180
        %v1238 = vunpack.c.h.b16 %v1180
        %v1239 = vunpack.c.l.b16 %v1181
        %v1240 = vunpack.c.h.b16 %v1181
        %v1241 = vunpack.c.l.b16 %v1182
        %v1242 = vunpack.c.h.b16 %v1182
        %v1243 = vpack.c.b16 %v1213, %v1211
        %v1244 = vpack.c.b16 %v1214, %v1212
        %v1245 = vpack.c.b16 %v1217, %v1215
        %v1246 = vpack.c.b16 %v1218, %v1216
        %v1247 = vpack.c.b16 %v1221, %v1219
        %v1248 = vpack.c.b16 %v1222, %v1220
        %v1249 = vpack.c.b16 %v1225, %v1223
        %v1250 = vpack.c.b16 %v1226, %v1224
        %v1251 = vpack.c.b16 %v1229, %v1227
        %v1252 = vpack.c.b16 %v1230, %v1228
        %v1253 = vpack.c.b16 %v1233, %v1231
        %v1254 = vpack.c.b16 %v1234, %v1232
        %v1255 = vpack.c.b16 %v1237, %v1235
        %v1256 = vpack.c.b16 %v1238, %v1236
        %v1257 = vpack.c.b16 %v1241, %v1239
        %v1258 = vpack.c.b16 %v1242, %v1240
        %1275 = vmatprep.subr.bf16.mxu0 %v1258
        %1276 = vmatpush1.bf16.msra.mxu0 %v1257
        %1277 = vmatprep.subr.bf16.mxu0 %v1256
        %1278 = vmatpush1.bf16.msra.mxu0 %v1255
        %1279 = vmatprep.subr.bf16.mxu0 %v1254
        %1280 = vmatpush1.bf16.msra.mxu0 %v1253
        %1281 = vmatprep.subr.bf16.mxu0 %v1252
        %1282 = vmatpush1.bf16.msra.mxu0 %v1251
        %1283 = vmatprep.subr.bf16.mxu0 %v1250
        %1284 = vmatpush1.bf16.msra.mxu0 %v1249
        %1285 = vmatprep.subr.bf16.mxu0 %v1248
        %1286 = vmatpush1.bf16.msra.mxu0 %v1247
        %1287 = vmatprep.subr.bf16.mxu0 %v1246
        %1288 = vmatpush1.bf16.msra.mxu0 %v1245
        %1289 = vmatprep.subr.bf16.mxu0 %v1244
        %1290 = vmatpush1.bf16.msra.mxu0 %v1243
        %1291 = vmatprep.subr.bf16.mxu0 0
        %1292 = vmatpush2.bf16.msra.mxu0 0
        %1293 = vmatprep.subr.bf16.mxu0 0
        %1294 = vmatpush2.bf16.msra.mxu0 0
        %1295 = vmatprep.subr.bf16.mxu0 0
        %1296 = vmatpush2.bf16.msra.mxu0 0
        %1297 = vmatprep.subr.bf16.mxu0 0
        %1298 = vmatpush2.bf16.msra.mxu0 0
        %1299 = vmatprep.subr.bf16.mxu0 0
        %1300 = vmatpush2.bf16.msra.mxu0 0
        %1301 = vmatprep.subr.bf16.mxu0 0
        %1302 = vmatpush2.bf16.msra.mxu0 0
        %1303 = vmatprep.subr.bf16.mxu0 0
        %1304 = vmatpush2.bf16.msra.mxu0 0
        %1305 = vmatprep.subr.bf16.mxu0 0
        %1306 = vmatpush2.bf16.msra.mxu0 0
        %1307 = vmatprep.mubr.bf16.mxu0 0
        %1308 = vmatmul.mubr.bf16.gmra.mxu0 %v1159
        %v1309 = vpop.f32.mrf.mxu0
        %v1310 = vadd.f32 %v1188, %v1309
        %v1311 = vpop.f32.mrf.mxu0
        %v1312 = vadd.f32 %v1192, %v1311
        %v1313 = vpop.f32.mrf.mxu0
        %v1314 = vadd.f32 %v1188, %v1313
        %v1315 = vpop.f32.mrf.mxu0
        %v1316 = vadd.f32 %v1192, %v1315
        %1317 = vmatprep.mubr.bf16.mxu0 0
        %1318 = vmatmul.mubr.bf16.gmra.mxu0 %v1160
        %v1319 = vpop.f32.mrf.mxu0
        %v1320 = vadd.f32 %v1188, %v1319
        %v1321 = vpop.f32.mrf.mxu0
        %v1322 = vadd.f32 %v1192, %v1321
        %v1323 = vpop.f32.mrf.mxu0
        %v1324 = vadd.f32 %v1188, %v1323
        %v1325 = vpop.f32.mrf.mxu0
        %v1326 = vadd.f32 %v1192, %v1325
        %1327 = vmatprep.mubr.bf16.mxu0 0
        %1328 = vmatmul.mubr.bf16.gmra.mxu0 %v1161
        %v1329 = vpop.f32.mrf.mxu0
        %v1330 = vadd.f32 %v1188, %v1329
        %v1331 = vpop.f32.mrf.mxu0
        %v1332 = vadd.f32 %v1192, %v1331
        %v1333 = vpop.f32.mrf.mxu0
        %v1334 = vadd.f32 %v1188, %v1333
        %v1335 = vpop.f32.mrf.mxu0
        %v1336 = vadd.f32 %v1192, %v1335
        %1337 = vmatprep.mubr.bf16.mxu0 0
        %1338 = vmatmul.mubr.bf16.gmra.mxu0 %v1162
        %v1339 = vpop.f32.mrf.mxu0
        %v1340 = vadd.f32 %v1188, %v1339
        %v1341 = vpop.f32.mrf.mxu0
        %v1342 = vadd.f32 %v1192, %v1341
        %v1343 = vpop.f32.mrf.mxu0
        %v1344 = vadd.f32 %v1188, %v1343
        %v1345 = vpop.f32.mrf.mxu0
        %v1346 = vadd.f32 %v1192, %v1345
        %1347 = vmatprep.mubr.bf16.mxu0 0
        %1348 = vmatmul.mubr.bf16.gmra.mxu0 %v1163
        %v1349 = vpop.f32.mrf.mxu0
        %v1350 = vadd.f32 %v1188, %v1349
        %v1351 = vpop.f32.mrf.mxu0
        %v1352 = vadd.f32 %v1192, %v1351
        %v1353 = vpop.f32.mrf.mxu0
        %v1354 = vadd.f32 %v1188, %v1353
        %v1355 = vpop.f32.mrf.mxu0
        %v1356 = vadd.f32 %v1192, %v1355
        %1357 = vmatprep.mubr.bf16.mxu0 0
        %1358 = vmatmul.mubr.bf16.gmra.mxu0 %v1164
        %v1359 = vpop.f32.mrf.mxu0
        %v1360 = vadd.f32 %v1188, %v1359
        %v1361 = vpop.f32.mrf.mxu0
        %v1362 = vadd.f32 %v1192, %v1361
        %v1363 = vpop.f32.mrf.mxu0
        %v1364 = vadd.f32 %v1188, %v1363
        %v1365 = vpop.f32.mrf.mxu0
        %v1366 = vadd.f32 %v1192, %v1365
        %1367 = vmatprep.mubr.bf16.mxu0 0
        %1368 = vmatmul.mubr.bf16.gmra.mxu0 %v1165
        %v1369 = vpop.f32.mrf.mxu0
        %v1370 = vadd.f32 %v1188, %v1369
        %v1371 = vpop.f32.mrf.mxu0
        %v1372 = vadd.f32 %v1192, %v1371
        %v1373 = vpop.f32.mrf.mxu0
        %v1374 = vadd.f32 %v1188, %v1373
        %v1375 = vpop.f32.mrf.mxu0
        %v1376 = vadd.f32 %v1192, %v1375
        %1377 = vmatprep.mubr.bf16.mxu0 0
        %1378 = vmatmul.mubr.bf16.gmra.mxu0 %v1166
        %v1379 = vpop.f32.mrf.mxu0
        %v1380 = vadd.f32 %v1188, %v1379
        %v1381 = vpop.f32.mrf.mxu0
        %v1382 = vadd.f32 %v1192, %v1381
        %v1383 = vpop.f32.mrf.mxu0
        %v1384 = vadd.f32 %v1188, %v1383
        %v1385 = vpop.f32.mrf.mxu0
        %v1386 = vadd.f32 %v1192, %v1385
        %1387 = vdwg.mxu0
        %v1388 = vmul.f32 %v1312, 1.442695
        %v1389 = vpow.pop %v1388
        %v1390 = vmul.f32 %v1316, 1.442695
        %v1391 = vpow.pop %v1390
        %v1392 = vmul.f32 %v1322, 1.442695
        %v1393 = vpow.pop %v1392
        %v1394 = vmul.f32 %v1326, 1.442695
        %v1395 = vpow.pop %v1394
        %v1396 = vmul.f32 %v1332, 1.442695
        %v1397 = vpow.pop %v1396
        %v1398 = vmul.f32 %v1336, 1.442695
        %v1399 = vpow.pop %v1398
        %v1400 = vmul.f32 %v1342, 1.442695
        %v1401 = vpow.pop %v1400
        %v1402 = vmul.f32 %v1346, 1.442695
        %v1403 = vpow.pop %v1402
        %v1404 = vmul.f32 %v1352, 1.442695
        %v1405 = vpow.pop %v1404
        %v1406 = vmul.f32 %v1356, 1.442695
        %v1407 = vpow.pop %v1406
        %v1408 = vmul.f32 %v1362, 1.442695
        %v1409 = vpow.pop %v1408
        %v1410 = vmul.f32 %v1366, 1.442695
        %v1411 = vpow.pop %v1410
        %v1412 = vmul.f32 %v1372, 1.442695
        %v1413 = vpow.pop %v1412
        %v1414 = vmul.f32 %v1376, 1.442695
        %v1415 = vpow.pop %v1414
        %v1416 = vmul.f32 %v1382, 1.442695
        %v1417 = vpow.pop %v1416
        %v1418 = vmul.f32 %v1386, 1.442695
        %v1419 = vpow.pop %v1418
        %v1420 = vld [vmem:[%s537] sm:$0xf]
        %v1421 = vld [vmem:[%s537 + $0x4] sm:$0xf]
        %v1422 = vld [vmem:[%s537 + $0x8] sm:$0xf]
        %v1423 = vld [vmem:[%s537 + $0xc] sm:$0xf]
        %v1424 = vld [vmem:[%s537 + $0x10] sm:$0xf]
        %v1425 = vld [vmem:[%s537 + $0x14] sm:$0xf]
        %v1426 = vld [vmem:[%s537 + $0x18] sm:$0xf]
        %v1427 = vld [vmem:[%s537 + $0x1c] sm:$0xf]
        %v1428 = vld [vmem:[%s537 + $0x20] sm:$0xf]
        %v1429 = vld [vmem:[%s537 + $0x24] sm:$0xf]
        %v1430 = vld [vmem:[%s537 + $0x28] sm:$0xf]
        %v1431 = vld [vmem:[%s537 + $0x2c] sm:$0xf]
        %v1432 = vld [vmem:[%s537 + $0x30] sm:$0xf]
        %v1433 = vld [vmem:[%s537 + $0x34] sm:$0xf]
        %v1434 = vld [vmem:[%s537 + $0x38] sm:$0xf]
        %v1435 = vld [vmem:[%s537 + $0x3c] sm:$0xf]
        %v1436 = vunpack.c.l.bf16 %v1420
        %v1437 = vunpack.c.l.bf16 %v1421
        %v1438 = vunpack.c.l.bf16 %v1422
        %v1439 = vunpack.c.l.bf16 %v1423
        %v1440 = vunpack.c.l.bf16 %v1424
        %v1441 = vunpack.c.l.bf16 %v1425
        %v1442 = vunpack.c.l.bf16 %v1426
        %v1443 = vunpack.c.l.bf16 %v1427
        %v1444 = vunpack.c.l.bf16 %v1428
        %v1445 = vunpack.c.l.bf16 %v1429
        %v1446 = vunpack.c.l.bf16 %v1430
        %v1447 = vunpack.c.l.bf16 %v1431
        %v1448 = vunpack.c.l.bf16 %v1432
        %v1449 = vunpack.c.l.bf16 %v1433
        %v1450 = vunpack.c.l.bf16 %v1434
        %v1451 = vunpack.c.l.bf16 %v1435
        %v1452 = vmul.f32 %v1389, %v1436
        %v1453 = vmul.f32 %v1391, %v1437
        %v1454 = vmul.f32 %v1393, %v1438
        %v1455 = vmul.f32 %v1395, %v1439
        %v1456 = vmul.f32 %v1397, %v1440
        %v1457 = vmul.f32 %v1399, %v1441
        %v1458 = vmul.f32 %v1401, %v1442
        %v1459 = vmul.f32 %v1403, %v1443
        %v1460 = vmul.f32 %v1405, %v1444
        %v1461 = vmul.f32 %v1407, %v1445
        %v1462 = vmul.f32 %v1409, %v1446
        %v1463 = vmul.f32 %v1411, %v1447
        %v1464 = vmul.f32 %v1413, %v1448
        %v1465 = vmul.f32 %v1415, %v1449
        %v1466 = vmul.f32 %v1417, %v1450
        %v1467 = vmul.f32 %v1419, %v1451
        %v1468 = vadd.f32 %v1310, %v1452
        %v1469 = vadd.f32 %v1314, %v1453
        %v1470 = vadd.f32 %v1320, %v1454
        %v1471 = vadd.f32 %v1324, %v1455
        %v1472 = vadd.f32 %v1330, %v1456
        %v1473 = vadd.f32 %v1334, %v1457
        %v1474 = vadd.f32 %v1340, %v1458
        %v1475 = vadd.f32 %v1344, %v1459
        %v1476 = vadd.f32 %v1350, %v1460
        %v1477 = vadd.f32 %v1354, %v1461
        %v1478 = vadd.f32 %v1360, %v1462
        %v1479 = vadd.f32 %v1364, %v1463
        %v1480 = vadd.f32 %v1370, %v1464
        %v1481 = vadd.f32 %v1374, %v1465
        %v1482 = vadd.f32 %v1380, %v1466
        %v1483 = vadd.f32 %v1384, %v1467
        %1484 = vst [vmem:[%s609] sm:$0xff] %v1310
        %1485 = vst [vmem:[%s609 + $0x8] sm:$0xff] %v1314
        %1486 = vst [vmem:[%s609 + $0x10] sm:$0xff] %v1320
        %1487 = vst [vmem:[%s609 + $0x18] sm:$0xff] %v1324
        %1488 = vst [vmem:[%s609 + $0x20] sm:$0xff] %v1330
        %1489 = vst [vmem:[%s609 + $0x28] sm:$0xff] %v1334
        %1490 = vst [vmem:[%s609 + $0x30] sm:$0xff] %v1340
        %1491 = vst [vmem:[%s609 + $0x38] sm:$0xff] %v1344
        %1492 = vst [vmem:[%s609 + $0x40] sm:$0xff] %v1350
        %1493 = vst [vmem:[%s609 + $0x48] sm:$0xff] %v1354
        %1494 = vst [vmem:[%s609 + $0x50] sm:$0xff] %v1360
        %1495 = vst [vmem:[%s609 + $0x58] sm:$0xff] %v1364
        %1496 = vst [vmem:[%s609 + $0x60] sm:$0xff] %v1370
        %1497 = vst [vmem:[%s609 + $0x68] sm:$0xff] %v1374
        %1498 = vst [vmem:[%s609 + $0x70] sm:$0xff] %v1380
        %1499 = vst [vmem:[%s609 + $0x78] sm:$0xff] %v1384
        %1500 = vst [vmem:[%s616] sm:$0xff] %v1389
        %1501 = vst [vmem:[%s616 + $0x8] sm:$0xff] %v1391
        %1502 = vst [vmem:[%s616 + $0x10] sm:$0xff] %v1393
        %1503 = vst [vmem:[%s616 + $0x18] sm:$0xff] %v1395
        %1504 = vst [vmem:[%s616 + $0x20] sm:$0xff] %v1397
        %1505 = vst [vmem:[%s616 + $0x28] sm:$0xff] %v1399
        %1506 = vst [vmem:[%s616 + $0x30] sm:$0xff] %v1401
        %1507 = vst [vmem:[%s616 + $0x38] sm:$0xff] %v1403
        %1508 = vst [vmem:[%s616 + $0x40] sm:$0xff] %v1405
        %1509 = vst [vmem:[%s616 + $0x48] sm:$0xff] %v1407
        %1510 = vst [vmem:[%s616 + $0x50] sm:$0xff] %v1409
        %1511 = vst [vmem:[%s616 + $0x58] sm:$0xff] %v1411
        %1512 = vst [vmem:[%s616 + $0x60] sm:$0xff] %v1413
        %1513 = vst [vmem:[%s616 + $0x68] sm:$0xff] %v1415
        %1514 = vst [vmem:[%s616 + $0x70] sm:$0xff] %v1417
        %1515 = vst [vmem:[%s616 + $0x78] sm:$0xff] %v1419
        %v1516 = vpack.c.bf16 %v1469, %v1468
        %v1517 = vpack.c.bf16 %v1471, %v1470
        %v1518 = vpack.c.bf16 %v1473, %v1472
        %v1519 = vpack.c.bf16 %v1475, %v1474
        %v1520 = vpack.c.bf16 %v1477, %v1476
        %v1521 = vpack.c.bf16 %v1479, %v1478
        %v1522 = vpack.c.bf16 %v1481, %v1480
        %v1523 = vpack.c.bf16 %v1483, %v1482
        %v1524 = vld [vmem:[#allocation11] sm:$0xf]
        %v1525 = vld [vmem:[#allocation11 + $0x4] sm:$0xf]
        %v1526 = vld [vmem:[#allocation11 + $0x8] sm:$0xf]
        %v1527 = vld [vmem:[#allocation11 + $0xc] sm:$0xf]
        %v1528 = vld [vmem:[#allocation11 + $0x10] sm:$0xf]
        %v1529 = vld [vmem:[#allocation11 + $0x14] sm:$0xf]
        %v1530 = vld [vmem:[#allocation11 + $0x18] sm:$0xf]
        %v1531 = vld [vmem:[#allocation11 + $0x1c] sm:$0xf]
        %v1532 = vld [vmem:[#allocation11 + $0x20] sm:$0xf]
        %v1533 = vld [vmem:[#allocation11 + $0x24] sm:$0xf]
        %v1534 = vld [vmem:[#allocation11 + $0x28] sm:$0xf]
        %v1535 = vld [vmem:[#allocation11 + $0x2c] sm:$0xf]
        %v1536 = vld [vmem:[#allocation11 + $0x30] sm:$0xf]
        %v1537 = vld [vmem:[#allocation11 + $0x34] sm:$0xf]
        %v1538 = vld [vmem:[#allocation11 + $0x38] sm:$0xf]
        %v1539 = vld [vmem:[#allocation11 + $0x3c] sm:$0xf]
        %v1540 = vld [vmem:[%s9] sm:$0x1]
        %v1542 = vlaneseq
        %v1543 = vshrl.u32 %v1542, 7
        %v1544 = vsub.s32 0, %v1543
        %v1545 = vrot.slane %v1540, %v1544
        %v1563 = vunpack.c.l.b16 %v1524
        %v1564 = vunpack.c.l.b16 %v1525
        %v1565 = vunpack.c.l.b16 %v1526
        %v1566 = vunpack.c.l.b16 %v1527
        %v1567 = vunpack.c.l.b16 %v1528
        %v1568 = vunpack.c.l.b16 %v1529
        %v1569 = vunpack.c.l.b16 %v1530
        %v1570 = vunpack.c.l.b16 %v1531
        %v1571 = vunpack.c.l.b16 %v1532
        %v1572 = vunpack.c.l.b16 %v1533
        %v1573 = vunpack.c.l.b16 %v1534
        %v1574 = vunpack.c.l.b16 %v1535
        %v1575 = vunpack.c.l.b16 %v1536
        %v1576 = vunpack.c.l.b16 %v1537
        %v1577 = vunpack.c.l.b16 %v1538
        %v1578 = vunpack.c.l.b16 %v1539
        %v1579 = vpack.c.b16 %v1564, %v1563
        %v1580 = vpack.c.b16 %v1566, %v1565
        %v1581 = vpack.c.b16 %v1568, %v1567
        %v1582 = vpack.c.b16 %v1570, %v1569
        %v1583 = vpack.c.b16 %v1572, %v1571
        %v1584 = vpack.c.b16 %v1574, %v1573
        %v1585 = vpack.c.b16 %v1576, %v1575
        %v1586 = vpack.c.b16 %v1578, %v1577
        %1595 = vmatprep.subr.bf16.mxu0 0
        %1596 = vmatpush1.bf16.msra.mxu0 %v1586
        %1597 = vmatprep.subr.bf16.mxu0 0
        %1598 = vmatpush1.bf16.msra.mxu0 %v1585
        %1599 = vmatprep.subr.bf16.mxu0 0
        %1600 = vmatpush1.bf16.msra.mxu0 %v1584
        %1601 = vmatprep.subr.bf16.mxu0 0
        %1602 = vmatpush1.bf16.msra.mxu0 %v1583
        %1603 = vmatprep.subr.bf16.mxu0 0
        %1604 = vmatpush1.bf16.msra.mxu0 %v1582
        %1605 = vmatprep.subr.bf16.mxu0 0
        %1606 = vmatpush1.bf16.msra.mxu0 %v1581
        %1607 = vmatprep.subr.bf16.mxu0 0
        %1608 = vmatpush1.bf16.msra.mxu0 %v1580
        %1609 = vmatprep.subr.bf16.mxu0 0
        %1610 = vmatpush1.bf16.msra.mxu0 %v1579
        %1611 = vmatprep.subr.bf16.mxu0 0
        %1612 = vmatpush2.bf16.msra.mxu0 0
        %1613 = vmatprep.subr.bf16.mxu0 0
        %1614 = vmatpush2.bf16.msra.mxu0 0
        %1615 = vmatprep.subr.bf16.mxu0 0
        %1616 = vmatpush2.bf16.msra.mxu0 0
        %1617 = vmatprep.subr.bf16.mxu0 0
        %1618 = vmatpush2.bf16.msra.mxu0 0
        %1619 = vmatprep.subr.bf16.mxu0 0
        %1620 = vmatpush2.bf16.msra.mxu0 0
        %1621 = vmatprep.subr.bf16.mxu0 0
        %1622 = vmatpush2.bf16.msra.mxu0 0
        %1623 = vmatprep.subr.bf16.mxu0 0
        %1624 = vmatpush2.bf16.msra.mxu0 0
        %1625 = vmatprep.subr.bf16.mxu0 0
        %1626 = vmatpush2.bf16.msra.mxu0 0
        %1627 = vmatprep.mubr.bf16.mxu0 0
        %1628 = vmatmul.mubr.bf16.gmra.mxu0 %v1516
        %v1629 = vpop.f32.mrf.mxu0
        %v1630 = vadd.f32 %v1545, %v1629
        %v1631 = vpop.f32.mrf.mxu0
        %v1632 = vpop.f32.mrf.mxu0
        %v1633 = vadd.f32 %v1545, %v1632
        %v1634 = vpop.f32.mrf.mxu0
        %1635 = vmatprep.mubr.bf16.mxu0 0
        %1636 = vmatmul.mubr.bf16.gmra.mxu0 %v1517
        %v1637 = vpop.f32.mrf.mxu0
        %v1638 = vadd.f32 %v1545, %v1637
        %v1639 = vpop.f32.mrf.mxu0
        %v1640 = vpop.f32.mrf.mxu0
        %v1641 = vadd.f32 %v1545, %v1640
        %v1642 = vpop.f32.mrf.mxu0
        %1643 = vmatprep.mubr.bf16.mxu0 0
        %1644 = vmatmul.mubr.bf16.gmra.mxu0 %v1518
        %v1645 = vpop.f32.mrf.mxu0
        %v1646 = vadd.f32 %v1545, %v1645
        %v1647 = vpop.f32.mrf.mxu0
        %v1648 = vpop.f32.mrf.mxu0
        %v1649 = vadd.f32 %v1545, %v1648
        %v1650 = vpop.f32.mrf.mxu0
        %1651 = vmatprep.mubr.bf16.mxu0 0
        %1652 = vmatmul.mubr.bf16.gmra.mxu0 %v1519
        %v1653 = vpop.f32.mrf.mxu0
        %v1654 = vadd.f32 %v1545, %v1653
        %v1655 = vpop.f32.mrf.mxu0
        %v1656 = vpop.f32.mrf.mxu0
        %v1657 = vadd.f32 %v1545, %v1656
        %v1658 = vpop.f32.mrf.mxu0
        %1659 = vmatprep.mubr.bf16.mxu0 0
        %1660 = vmatmul.mubr.bf16.gmra.mxu0 %v1520
        %v1661 = vpop.f32.mrf.mxu0
        %v1662 = vadd.f32 %v1545, %v1661
        %v1663 = vpop.f32.mrf.mxu0
        %v1664 = vpop.f32.mrf.mxu0
        %v1665 = vadd.f32 %v1545, %v1664
        %v1666 = vpop.f32.mrf.mxu0
        %1667 = vmatprep.mubr.bf16.mxu0 0
        %1668 = vmatmul.mubr.bf16.gmra.mxu0 %v1521
        %v1669 = vpop.f32.mrf.mxu0
        %v1670 = vadd.f32 %v1545, %v1669
        %v1671 = vpop.f32.mrf.mxu0
        %v1672 = vpop.f32.mrf.mxu0
        %v1673 = vadd.f32 %v1545, %v1672
        %v1674 = vpop.f32.mrf.mxu0
        %1675 = vmatprep.mubr.bf16.mxu0 0
        %1676 = vmatmul.mubr.bf16.gmra.mxu0 %v1522
        %v1677 = vpop.f32.mrf.mxu0
        %v1678 = vadd.f32 %v1545, %v1677
        %v1679 = vpop.f32.mrf.mxu0
        %v1680 = vpop.f32.mrf.mxu0
        %v1681 = vadd.f32 %v1545, %v1680
        %v1682 = vpop.f32.mrf.mxu0
        %1683 = vmatprep.mubr.bf16.mxu0 0
        %1684 = vmatmul.mubr.bf16.gmra.mxu0 %v1523
        %v1685 = vpop.f32.mrf.mxu0
        %v1686 = vadd.f32 %v1545, %v1685
        %v1687 = vpop.f32.mrf.mxu0
        %v1688 = vpop.f32.mrf.mxu0
        %v1689 = vadd.f32 %v1545, %v1688
        %v1690 = vpop.f32.mrf.mxu0
        %1691 = vdwg.mxu0
        %v1692 = vmax.f32 %v1630, 0.0
        %v1693 = vmax.f32 %v1633, 0.0
        %v1694 = vmax.f32 %v1638, 0.0
        %v1695 = vmax.f32 %v1641, 0.0
        %v1696 = vmax.f32 %v1646, 0.0
        %v1697 = vmax.f32 %v1649, 0.0
        %v1698 = vmax.f32 %v1654, 0.0
        %v1699 = vmax.f32 %v1657, 0.0
        %v1700 = vmax.f32 %v1662, 0.0
        %v1701 = vmax.f32 %v1665, 0.0
        %v1702 = vmax.f32 %v1670, 0.0
        %v1703 = vmax.f32 %v1673, 0.0
        %v1704 = vmax.f32 %v1678, 0.0
        %v1705 = vmax.f32 %v1681, 0.0
        %v1706 = vmax.f32 %v1686, 0.0
        %v1707 = vmax.f32 %v1689, 0.0
        %v1708 = vpack.c.bf16 %v1693, %v1692
        %v1709 = vpack.c.bf16 %v1695, %v1694
        %v1710 = vpack.c.bf16 %v1697, %v1696
        %v1711 = vpack.c.bf16 %v1699, %v1698
        %v1712 = vpack.c.bf16 %v1701, %v1700
        %v1713 = vpack.c.bf16 %v1703, %v1702
        %v1714 = vpack.c.bf16 %v1705, %v1704
        %v1715 = vpack.c.bf16 %v1707, %v1706
        %v1716 = vld [vmem:[#allocation13] sm:$0xff]
        %v1717 = vld [vmem:[#allocation13 + $0x8] sm:$0xff]
        %v1718 = vld [vmem:[#allocation13 + $0x10] sm:$0xff]
        %v1719 = vld [vmem:[#allocation13 + $0x18] sm:$0xff]
        %v1720 = vld [vmem:[#allocation13 + $0x20] sm:$0xff]
        %v1721 = vld [vmem:[#allocation13 + $0x28] sm:$0xff]
        %v1722 = vld [vmem:[#allocation13 + $0x30] sm:$0xff]
        %v1723 = vld [vmem:[#allocation13 + $0x38] sm:$0xff]
        %v1724 = vld [vmem:[#allocation13 + $0x40] sm:$0xff]
        %v1725 = vld [vmem:[#allocation13 + $0x48] sm:$0xff]
        %v1726 = vld [vmem:[#allocation13 + $0x50] sm:$0xff]
        %v1727 = vld [vmem:[#allocation13 + $0x58] sm:$0xff]
        %v1728 = vld [vmem:[#allocation13 + $0x60] sm:$0xff]
        %v1729 = vld [vmem:[#allocation13 + $0x68] sm:$0xff]
        %v1730 = vld [vmem:[#allocation13 + $0x70] sm:$0xff]
        %v1731 = vld [vmem:[#allocation13 + $0x78] sm:$0xff]
        %v1732 = vld [vmem:[%s11] sm:$0x3]
        %v1734 = vlaneseq
        %v1735 = vshrl.u32 %v1734, 7
        %v1736 = vsub.s32 0, %v1735
        %v1737 = vrot.slane %v1732, %v1736
        %v1738 = vlaneseq
        %v1739 = vshrl.u32 %v1738, 7
        %v1740 = vsub.s32 1, %v1739
        %v1741 = vrot.slane %v1732, %v1740
        %v1760 = vunpack.c.l.b16 %v1716
        %v1761 = vunpack.c.h.b16 %v1716
        %v1762 = vunpack.c.l.b16 %v1717
        %v1763 = vunpack.c.h.b16 %v1717
        %v1764 = vunpack.c.l.b16 %v1718
        %v1765 = vunpack.c.h.b16 %v1718
        %v1766 = vunpack.c.l.b16 %v1719
        %v1767 = vunpack.c.h.b16 %v1719
        %v1768 = vunpack.c.l.b16 %v1720
        %v1769 = vunpack.c.h.b16 %v1720
        %v1770 = vunpack.c.l.b16 %v1721
        %v1771 = vunpack.c.h.b16 %v1721
        %v1772 = vunpack.c.l.b16 %v1722
        %v1773 = vunpack.c.h.b16 %v1722
        %v1774 = vunpack.c.l.b16 %v1723
        %v1775 = vunpack.c.h.b16 %v1723
        %v1776 = vunpack.c.l.b16 %v1724
        %v1777 = vunpack.c.h.b16 %v1724
        %v1778 = vunpack.c.l.b16 %v1725
        %v1779 = vunpack.c.h.b16 %v1725
        %v1780 = vunpack.c.l.b16 %v1726
        %v1781 = vunpack.c.h.b16 %v1726
        %v1782 = vunpack.c.l.b16 %v1727
        %v1783 = vunpack.c.h.b16 %v1727
        %v1784 = vunpack.c.l.b16 %v1728
        %v1785 = vunpack.c.h.b16 %v1728
        %v1786 = vunpack.c.l.b16 %v1729
        %v1787 = vunpack.c.h.b16 %v1729
        %v1788 = vunpack.c.l.b16 %v1730
        %v1789 = vunpack.c.h.b16 %v1730
        %v1790 = vunpack.c.l.b16 %v1731
        %v1791 = vunpack.c.h.b16 %v1731
        %v1792 = vpack.c.b16 %v1762, %v1760
        %v1793 = vpack.c.b16 %v1763, %v1761
        %v1794 = vpack.c.b16 %v1766, %v1764
        %v1795 = vpack.c.b16 %v1767, %v1765
        %v1796 = vpack.c.b16 %v1770, %v1768
        %v1797 = vpack.c.b16 %v1771, %v1769
        %v1798 = vpack.c.b16 %v1774, %v1772
        %v1799 = vpack.c.b16 %v1775, %v1773
        %v1800 = vpack.c.b16 %v1778, %v1776
        %v1801 = vpack.c.b16 %v1779, %v1777
        %v1802 = vpack.c.b16 %v1782, %v1780
        %v1803 = vpack.c.b16 %v1783, %v1781
        %v1804 = vpack.c.b16 %v1786, %v1784
        %v1805 = vpack.c.b16 %v1787, %v1785
        %v1806 = vpack.c.b16 %v1790, %v1788
        %v1807 = vpack.c.b16 %v1791, %v1789
        %1824 = vmatprep.subr.bf16.mxu0 %v1807
        %1825 = vmatpush1.bf16.msra.mxu0 %v1806
        %1826 = vmatprep.subr.bf16.mxu0 %v1805
        %1827 = vmatpush1.bf16.msra.mxu0 %v1804
        %1828 = vmatprep.subr.bf16.mxu0 %v1803
        %1829 = vmatpush1.bf16.msra.mxu0 %v1802
        %1830 = vmatprep.subr.bf16.mxu0 %v1801
        %1831 = vmatpush1.bf16.msra.mxu0 %v1800
        %1832 = vmatprep.subr.bf16.mxu0 %v1799
        %1833 = vmatpush1.bf16.msra.mxu0 %v1798
        %1834 = vmatprep.subr.bf16.mxu0 %v1797
        %1835 = vmatpush1.bf16.msra.mxu0 %v1796
        %1836 = vmatprep.subr.bf16.mxu0 %v1795
        %1837 = vmatpush1.bf16.msra.mxu0 %v1794
        %1838 = vmatprep.subr.bf16.mxu0 %v1793
        %1839 = vmatpush1.bf16.msra.mxu0 %v1792
        %1840 = vmatprep.subr.bf16.mxu0 0
        %1841 = vmatpush2.bf16.msra.mxu0 0
        %1842 = vmatprep.subr.bf16.mxu0 0
        %1843 = vmatpush2.bf16.msra.mxu0 0
        %1844 = vmatprep.subr.bf16.mxu0 0
        %1845 = vmatpush2.bf16.msra.mxu0 0
        %1846 = vmatprep.subr.bf16.mxu0 0
        %1847 = vmatpush2.bf16.msra.mxu0 0
        %1848 = vmatprep.subr.bf16.mxu0 0
        %1849 = vmatpush2.bf16.msra.mxu0 0
        %1850 = vmatprep.subr.bf16.mxu0 0
        %1851 = vmatpush2.bf16.msra.mxu0 0
        %1852 = vmatprep.subr.bf16.mxu0 0
        %1853 = vmatpush2.bf16.msra.mxu0 0
        %1854 = vmatprep.subr.bf16.mxu0 0
        %1855 = vmatpush2.bf16.msra.mxu0 0
        %1856 = vmatprep.mubr.bf16.mxu0 0
        %1857 = vmatmul.mubr.bf16.gmra.mxu0 %v1708
        %v1858 = vpop.f32.mrf.mxu0
        %v1859 = vadd.f32 %v1737, %v1858
        %v1860 = vpop.f32.mrf.mxu0
        %v1861 = vadd.f32 %v1741, %v1860
        %v1862 = vpop.f32.mrf.mxu0
        %v1863 = vadd.f32 %v1737, %v1862
        %v1864 = vpop.f32.mrf.mxu0
        %v1865 = vadd.f32 %v1741, %v1864
        %1866 = vmatprep.mubr.bf16.mxu0 0
        %1867 = vmatmul.mubr.bf16.gmra.mxu0 %v1709
        %v1868 = vpop.f32.mrf.mxu0
        %v1869 = vadd.f32 %v1737, %v1868
        %v1870 = vpop.f32.mrf.mxu0
        %v1871 = vadd.f32 %v1741, %v1870
        %v1872 = vpop.f32.mrf.mxu0
        %v1873 = vadd.f32 %v1737, %v1872
        %v1874 = vpop.f32.mrf.mxu0
        %v1875 = vadd.f32 %v1741, %v1874
        %1876 = vmatprep.mubr.bf16.mxu0 0
        %1877 = vmatmul.mubr.bf16.gmra.mxu0 %v1710
        %v1878 = vpop.f32.mrf.mxu0
        %v1879 = vadd.f32 %v1737, %v1878
        %v1880 = vpop.f32.mrf.mxu0
        %v1881 = vadd.f32 %v1741, %v1880
        %v1882 = vpop.f32.mrf.mxu0
        %v1883 = vadd.f32 %v1737, %v1882
        %v1884 = vpop.f32.mrf.mxu0
        %v1885 = vadd.f32 %v1741, %v1884
        %1886 = vmatprep.mubr.bf16.mxu0 0
        %1887 = vmatmul.mubr.bf16.gmra.mxu0 %v1711
        %v1888 = vpop.f32.mrf.mxu0
        %v1889 = vadd.f32 %v1737, %v1888
        %v1890 = vpop.f32.mrf.mxu0
        %v1891 = vadd.f32 %v1741, %v1890
        %v1892 = vpop.f32.mrf.mxu0
        %v1893 = vadd.f32 %v1737, %v1892
        %v1894 = vpop.f32.mrf.mxu0
        %v1895 = vadd.f32 %v1741, %v1894
        %1896 = vmatprep.mubr.bf16.mxu0 0
        %1897 = vmatmul.mubr.bf16.gmra.mxu0 %v1712
        %v1898 = vpop.f32.mrf.mxu0
        %v1899 = vadd.f32 %v1737, %v1898
        %v1900 = vpop.f32.mrf.mxu0
        %v1901 = vadd.f32 %v1741, %v1900
        %v1902 = vpop.f32.mrf.mxu0
        %v1903 = vadd.f32 %v1737, %v1902
        %v1904 = vpop.f32.mrf.mxu0
        %v1905 = vadd.f32 %v1741, %v1904
        %1906 = vmatprep.mubr.bf16.mxu0 0
        %1907 = vmatmul.mubr.bf16.gmra.mxu0 %v1713
        %v1908 = vpop.f32.mrf.mxu0
        %v1909 = vadd.f32 %v1737, %v1908
        %v1910 = vpop.f32.mrf.mxu0
        %v1911 = vadd.f32 %v1741, %v1910
        %v1912 = vpop.f32.mrf.mxu0
        %v1913 = vadd.f32 %v1737, %v1912
        %v1914 = vpop.f32.mrf.mxu0
        %v1915 = vadd.f32 %v1741, %v1914
        %1916 = vmatprep.mubr.bf16.mxu0 0
        %1917 = vmatmul.mubr.bf16.gmra.mxu0 %v1714
        %v1918 = vpop.f32.mrf.mxu0
        %v1919 = vadd.f32 %v1737, %v1918
        %v1920 = vpop.f32.mrf.mxu0
        %v1921 = vadd.f32 %v1741, %v1920
        %v1922 = vpop.f32.mrf.mxu0
        %v1923 = vadd.f32 %v1737, %v1922
        %v1924 = vpop.f32.mrf.mxu0
        %v1925 = vadd.f32 %v1741, %v1924
        %1926 = vmatprep.mubr.bf16.mxu0 0
        %1927 = vmatmul.mubr.bf16.gmra.mxu0 %v1715
        %v1928 = vpop.f32.mrf.mxu0
        %v1929 = vadd.f32 %v1737, %v1928
        %v1930 = vpop.f32.mrf.mxu0
        %v1931 = vadd.f32 %v1741, %v1930
        %v1932 = vpop.f32.mrf.mxu0
        %v1933 = vadd.f32 %v1737, %v1932
        %v1934 = vpop.f32.mrf.mxu0
        %v1935 = vadd.f32 %v1741, %v1934
        %1936 = vdwg.mxu0
        %v1937 = vmax.f32 %v1859, 0.0
        %v1938 = vmax.f32 %v1861, 0.0
        %v1939 = vmax.f32 %v1863, 0.0
        %v1940 = vmax.f32 %v1865, 0.0
        %v1941 = vmax.f32 %v1869, 0.0
        %v1942 = vmax.f32 %v1871, 0.0
        %v1943 = vmax.f32 %v1873, 0.0
        %v1944 = vmax.f32 %v1875, 0.0
        %v1945 = vmax.f32 %v1879, 0.0
        %v1946 = vmax.f32 %v1881, 0.0
        %v1947 = vmax.f32 %v1883, 0.0
        %v1948 = vmax.f32 %v1885, 0.0
        %v1949 = vmax.f32 %v1889, 0.0
        %v1950 = vmax.f32 %v1891, 0.0
        %v1951 = vmax.f32 %v1893, 0.0
        %v1952 = vmax.f32 %v1895, 0.0
        %v1953 = vmax.f32 %v1899, 0.0
        %v1954 = vmax.f32 %v1901, 0.0
        %v1955 = vmax.f32 %v1903, 0.0
        %v1956 = vmax.f32 %v1905, 0.0
        %v1957 = vmax.f32 %v1909, 0.0
        %v1958 = vmax.f32 %v1911, 0.0
        %v1959 = vmax.f32 %v1913, 0.0
        %v1960 = vmax.f32 %v1915, 0.0
        %v1961 = vmax.f32 %v1919, 0.0
        %v1962 = vmax.f32 %v1921, 0.0
        %v1963 = vmax.f32 %v1923, 0.0
        %v1964 = vmax.f32 %v1925, 0.0
        %v1965 = vmax.f32 %v1929, 0.0
        %v1966 = vmax.f32 %v1931, 0.0
        %v1967 = vmax.f32 %v1933, 0.0
        %v1968 = vmax.f32 %v1935, 0.0
        %1969 = vst [vmem:[%s602] sm:$0xff] %v1937
        %1970 = vst [vmem:[%s602 + $0x8] sm:$0xff] %v1938
        %1971 = vst [vmem:[%s602 + $0x10] sm:$0xff] %v1939
        %1972 = vst [vmem:[%s602 + $0x18] sm:$0xff] %v1940
        %1973 = vst [vmem:[%s602 + $0x20] sm:$0xff] %v1941
        %1974 = vst [vmem:[%s602 + $0x28] sm:$0xff] %v1942
        %1975 = vst [vmem:[%s602 + $0x30] sm:$0xff] %v1943
        %1976 = vst [vmem:[%s602 + $0x38] sm:$0xff] %v1944
        %1977 = vst [vmem:[%s602 + $0x40] sm:$0xff] %v1945
        %1978 = vst [vmem:[%s602 + $0x48] sm:$0xff] %v1946
        %1979 = vst [vmem:[%s602 + $0x50] sm:$0xff] %v1947
        %1980 = vst [vmem:[%s602 + $0x58] sm:$0xff] %v1948
        %1981 = vst [vmem:[%s602 + $0x60] sm:$0xff] %v1949
        %1982 = vst [vmem:[%s602 + $0x68] sm:$0xff] %v1950
        %1983 = vst [vmem:[%s602 + $0x70] sm:$0xff] %v1951
        %1984 = vst [vmem:[%s602 + $0x78] sm:$0xff] %v1952
        %1985 = vst [vmem:[%s602 + $0x80] sm:$0xff] %v1953
        %1986 = vst [vmem:[%s602 + $0x88] sm:$0xff] %v1954
        %1987 = vst [vmem:[%s602 + $0x90] sm:$0xff] %v1955
        %1988 = vst [vmem:[%s602 + $0x98] sm:$0xff] %v1956
        %1989 = vst [vmem:[%s602 + $0xa0] sm:$0xff] %v1957
        %1990 = vst [vmem:[%s602 + $0xa8] sm:$0xff] %v1958
        %1991 = vst [vmem:[%s602 + $0xb0] sm:$0xff] %v1959
        %1992 = vst [vmem:[%s602 + $0xb8] sm:$0xff] %v1960
        %1993 = vst [vmem:[%s602 + $0xc0] sm:$0xff] %v1961
        %1994 = vst [vmem:[%s602 + $0xc8] sm:$0xff] %v1962
        %1995 = vst [vmem:[%s602 + $0xd0] sm:$0xff] %v1963
        %1996 = vst [vmem:[%s602 + $0xd8] sm:$0xff] %v1964
        %1997 = vst [vmem:[%s602 + $0xe0] sm:$0xff] %v1965
        %1998 = vst [vmem:[%s602 + $0xe8] sm:$0xff] %v1966
        %1999 = vst [vmem:[%s602 + $0xf0] sm:$0xff] %v1967
        %2000 = vst [vmem:[%s602 + $0xf8] sm:$0xff] %v1968
        %s2001 = sand.u32 %s310, 1
        %s2002 = scalar_lea.sflag [#allocation4], %s2001
        %s2003 = sand.u32 %s310, 1
        %s2004 = smul.addr %s2003, 256
        %s2005 = scalar_lea.vmem [#allocation14], %s2004
        %s2006 = sand.u32 %s40, 1
        %s2007 = scalar_lea.sflag [#allocation16], %s2006
        %s2008 = sand.u32 %s336, 1
        %s2009 = smul.addr %s2008, 128
        %s2010 = scalar_lea.vmem [#allocation15], %s2009
        %s2011 = sand.u32 %s40, 1
        %s2012 = scalar_lea.sflag [#allocation16], %s2011
        %s2013 = sand.u32 %s362, 1
        %s2014 = smul.addr %s2013, 128
        %s2015 = scalar_lea.vmem [#allocation17], %s2014
        // Predicated region
        $region97: #{tpu_custom_call.1} parent=67 // pred_check
          %p2016 = pneg %p320
        $region98: #{tpu_custom_call.1} parent=67 // pred_check_branch
          %2018 = sbr.rel (%p2016) target = $region100
        $region99: #{tpu_custom_call.1} parent=67 // pred_region
          %s2019 = smul.u32 16, %s40
          %s2021 = ssub.s32 4096, 4096
          %2022 = vsyncadd %s2002, %s2021
          %s2023 = smul.addr %s2019, 2
          %s2024 = smul.addr %s2023, 128
          %s2025 = scalar_lea.hbm %s12, %s2024
          %s2026 = sshll.u32 %s2005, 4
          %s2027 = int_to_ptr.vmem [resolvable:$true] %s2026
          %2032 = dma.vmem_to_hbm [thread:$0]  %s2027, 4096, %s2025, %s2002, 256, 256, 16
        $region100: #{tpu_custom_call.1} parent=67 // pred_fallthru
          _
        // Predicated region
        $region101: #{tpu_custom_call.1} parent=67 // pred_check
          %p2033 = pneg %p346
        $region102: #{tpu_custom_call.1} parent=67 // pred_check_branch
          %2035 = sbr.rel (%p2033) target = $region104
        $region103: #{tpu_custom_call.1} parent=67 // pred_region
          %s2036 = smul.u32 16, %s40
          %s2038 = ssub.s32 2048, 2048
          %2039 = vsyncadd %s2007, %s2038
          %s2040 = smul.addr %s2036, 128
          %s2041 = scalar_lea.hbm %s13, %s2040
          %s2042 = sshll.u32 %s2010, 4
          %s2043 = int_to_ptr.vmem [resolvable:$true] %s2042
          %2048 = dma.vmem_to_hbm [thread:$0]  %s2043, 2048, %s2041, %s2007, 128, 128, 8
        $region104: #{tpu_custom_call.1} parent=67 // pred_fallthru
          _
        // Predicated region
        $region105: #{tpu_custom_call.1} parent=67 // pred_check
          %p2049 = pneg %p372
        $region106: #{tpu_custom_call.1} parent=67 // pred_check_branch
          %2051 = sbr.rel (%p2049) target = $region108
        $region107: #{tpu_custom_call.1} parent=67 // pred_region
          %s2052 = smul.u32 16, %s40
          %s2054 = ssub.s32 2048, 2048
          %2055 = vsyncadd %s2012, %s2054
          %s2056 = smul.addr %s2052, 128
          %s2057 = scalar_lea.hbm %s14, %s2056
          %s2058 = sshll.u32 %s2015, 4
          %s2059 = int_to_ptr.vmem [resolvable:$true] %s2058
          %2064 = dma.vmem_to_hbm [thread:$0]  %s2059, 2048, %s2057, %s2012, 128, 128, 8
        $region108: #{tpu_custom_call.1} parent=67 // pred_fallthru
          _
      $region68: #{tpu_custom_call.1} parent=5 // pred_fallthru
        _
      %p2065 = scmp.le.s32.totalorder 2, %s35
      // Predicated region
      $region109: #{tpu_custom_call.1} parent=5 // pred_check
        %p2066 = pneg %p2065
      $region110: #{tpu_custom_call.1} parent=5 // pred_check_branch
        %2068 = sbr.rel (%p2066) target = $region112
      $region111: #{tpu_custom_call.1} parent=5 // pred_region
        %s2069 = ssub.s32 %s35, 2
        // Predicated region
        $region113: #{tpu_custom_call.1} parent=111 // pred_check
          %p2070 = pneg %p326
        $region114: #{tpu_custom_call.1} parent=111 // pred_check_branch
          %2072 = sbr.rel (%p2070) target = $region116
        $region115: #{tpu_custom_call.1} parent=111 // pred_region
          %s2073 = sand.u32 %s311, 1
          %s2074 = scalar_lea.sflag [#allocation4], %s2073
          %s2075 = sand.u32 %s311, 1
          %s2076 = smul.addr %s2075, 256
          %s2077 = scalar_lea.vmem [#allocation14], %s2076
          %2078 = dma.done %s2074, 4096
        $region116: #{tpu_custom_call.1} parent=111 // pred_fallthru
          _
        // Predicated region
        $region117: #{tpu_custom_call.1} parent=111 // pred_check
          %p2079 = pneg %p352
        $region118: #{tpu_custom_call.1} parent=111 // pred_check_branch
          %2081 = sbr.rel (%p2079) target = $region120
        $region119: #{tpu_custom_call.1} parent=111 // pred_region
          %s2082 = sand.u32 %s41, 1
          %s2083 = scalar_lea.sflag [#allocation16], %s2082
          %s2084 = sand.u32 %s337, 1
          %s2085 = smul.addr %s2084, 128
          %s2086 = scalar_lea.vmem [#allocation15], %s2085
          %2087 = dma.done %s2083, 2048
        $region120: #{tpu_custom_call.1} parent=111 // pred_fallthru
          _
        // Predicated region
        $region121: #{tpu_custom_call.1} parent=111 // pred_check
          %p2088 = pneg %p378
        $region122: #{tpu_custom_call.1} parent=111 // pred_check_branch
          %2090 = sbr.rel (%p2088) target = $region124
        $region123: #{tpu_custom_call.1} parent=111 // pred_region
          %s2091 = sand.u32 %s41, 1
          %s2092 = scalar_lea.sflag [#allocation16], %s2091
          %s2093 = sand.u32 %s363, 1
          %s2094 = smul.addr %s2093, 128
          %s2095 = scalar_lea.vmem [#allocation17], %s2094
          %2096 = dma.done %s2092, 2048
        $region124: #{tpu_custom_call.1} parent=111 // pred_fallthru
          _
      $region112: #{tpu_custom_call.1} parent=5 // pred_fallthru
        _
    $region6: #{tpu_custom_call.1} parent=1 // loop_footer
      %s39 = sadd.s32 1, %s35
    $region7: #{tpu_custom_call.1} parent=1 // loop_footer_branch
      %34 = sbr.rel target = $region3
    $region8: #{tpu_custom_call.1} parent=1 // loop_exit
      _
    %2097 = vsyncpa [#allocation3], 1
    %s2098 = scalar_lea.sflag [#allocation3], 1
    %2099 = vsyncpa %s2098, 1
    %2100 = vsyncpa [#allocation6], 1
    %s2101 = scalar_lea.sflag [#allocation6], 1
    %2102 = vsyncpa %s2101, 1
    %2103 = vsyncpa [#allocation9], 1
    %2104 = vsyncpa [#allocation12], 1
    %2105 = vsyncpa [#allocation4], 1
    %s2106 = scalar_lea.sflag [#allocation4], 1
    %2107 = vsyncpa %s2106, 1
    %2108 = vsyncpa [#allocation16], 1
    %s2109 = scalar_lea.sflag [#allocation16], 1
    %2110 = vsyncpa %s2109, 1

</llo_original>
